<compile_context>
chip_gen: v5e
topology: v5e:2x2
jax: 0.10.0
libtpu: 0.0.40
codegen_flags: <defaults>
</compile_context>

<pallas_src>
import functools
import math

import jax
import jax.numpy as jnp
from jax import lax
from jax.experimental import pallas as pl
from jax.experimental.pallas import tpu as pltpu


# ----------------------------------------------------------------------------
# Pallas kernel: full bottleneck MLP for one image, channel-major throughout.
# ----------------------------------------------------------------------------
def _bottleneck_kernel(
    x_ref,      # (1, Cin, HW)    native NCHW, spatial flattened (lane-dense)
    masks_ref,  # (9, HW)         per-tap {0,1} validity mask over flat (h, w)
    w1_ref,     # (Cf, Cin)       BN1 folded in
    b1_ref,     # (Cf, 1)
    w2_ref,     # (9, Cf, Cf)     BN2 folded in, [tap, cout, cin], tap = dy*3+dx
    b2_ref,     # (Cf, 1)
    w3_ref,     # (Cout, Cf)
    b3_ref,     # (Cout, 1)
    o_ref,      # (1, Cout, HW)   lane-dense output
    *,
    width,      # W (static)
):
    hw = x_ref.shape[-1]

    # ---- conv1 (1x1) + folded BN1 + ReLU: one matmul, channel-major result. --
    x = x_ref[0]                                              # (Cin, HW)
    h1 = jnp.dot(w1_ref[...], x, preferred_element_type=jnp.float32)  # (Cf, HW)
    h1 = jnp.maximum(h1 + b1_ref[...], 0.0)

    # ---- conv2 (3x3, padding=1) + folded BN2 + ReLU ---------------------------
    # 9 shifted-tap matmuls accumulating in f32.  The lane-roll runs on the XLU
    # (free relative to VPU/store slots); the boundary mask is a precomputed
    # (1, HW) multiplier so no in-kernel index math is needed.
    acc = None
    for tap in range(9):
        dy, dx = tap // 3, tap % 3
        off = (dy - 1) * width + (dx - 1)                     # flat lane offset
        if off == 0:
            t = h1                                            # center tap: no shift/mask
        else:
            t = pltpu.roll(h1, shift=(-off) % hw, axis=1)     # out[p] = h1[p + off]
            t = t * masks_ref[tap:tap + 1, :]                 # zero wrapped taps
        p = jnp.dot(w2_ref[tap], t, preferred_element_type=jnp.float32)  # (Cf, HW)
        acc = p if acc is None else acc + p
    h2 = jnp.maximum(acc + b2_ref[...], 0.0)                  # (Cf, HW)

    # ---- conv3 (1x1): channel-major output -> lane-dense store. --------------
    out = jnp.dot(w3_ref[...], h2, preferred_element_type=jnp.float32) + b3_ref[...]
    o_ref[0] = out.astype(o_ref.dtype)                        # (Cout, HW)


# ----------------------------------------------------------------------------
# Wrapper: NCHW in / NCHW out, grid over batch (one image per step).
# ----------------------------------------------------------------------------
def _make_tap_masks(H, W):
    """(9, H*W) float32 {0,1}: validity of each 3x3 tap at each output pixel."""
    p = jnp.arange(H * W, dtype=jnp.int32)
    r = p // W
    c = p % W
    masks = []
    for tap in range(9):
        oy, ox = tap // 3 - 1, tap % 3 - 1
        valid = (r + oy >= 0) & (r + oy < H) & (c + ox >= 0) & (c + ox < W)
        masks.append(valid.astype(jnp.float32))
    return jnp.stack(masks, axis=0)


def mlp_bottleneck_forward(x_nchw, folded_params):
    w1, b1, w2, b2, w3, b3 = folded_params
    N, Cin, H, W = x_nchw.shape
    HW = H * W
    Cout = w3.shape[0]

    x_flat = x_nchw.reshape(N, Cin, HW)        # free reshape, stays channel-major
    masks = _make_tap_masks(H, W)

    kernel = functools.partial(_bottleneck_kernel, width=W)
    full = lambda a: pl.BlockSpec(a.shape, lambda n, _nd=a.ndim: (0,) * _nd)

    out_flat = pl.pallas_call(
        kernel,
        out_shape=jax.ShapeDtypeStruct((N, Cout, HW), jnp.float32),
        grid_spec=pltpu.PrefetchScalarGridSpec(
            num_scalar_prefetch=0,
            grid=(N,),                          # >=2 steps for N>=2: both v7x TCs used
            in_specs=[
                pl.BlockSpec((1, Cin, HW), lambda n: (n, 0, 0)),
                full(masks), full(w1), full(b1), full(w2), full(b2),
                full(w3), full(b3),
            ],
            out_specs=pl.BlockSpec((1, Cout, HW), lambda n: (n, 0, 0)),
        ),
        compiler_params=pltpu.CompilerParams(
            dimension_semantics=("parallel",),
        ),
    )(x_flat, masks, w1, b1, w2, b2, w3, b3)

    # (N, Cout, H*W) -> (N, Cout, H, W): pure reshape, no transpose.
    return out_flat.reshape(N, Cout, H, W)


# ----------------------------------------------------------------------------
# Parameter construction (matches nn.Module __init__ shapes / init) + folding.
# ----------------------------------------------------------------------------
def make_raw_params(key, embed_dim, dim_feedforward):
    def xavier(k, out_ch, in_ch, kh, kw):
        fan_in = in_ch * kh * kw
        fan_out = out_ch * kh * kw
        bound = math.sqrt(6.0 / (fan_in + fan_out))
        return jax.random.uniform(k, (out_ch, in_ch, kh, kw), jnp.float32,
                                  -bound, bound)

    ks = jax.random.split(key, 11)
    Cf, Ce = dim_feedforward, embed_dim
    return {
        "conv1_w": xavier(ks[0], Cf, Ce, 1, 1),
        "conv1_b": jnp.zeros((Cf,), jnp.float32),
        "conv2_w": xavier(ks[1], Cf, Cf, 3, 3),
        "conv2_b": jnp.zeros((Cf,), jnp.float32),
        "conv3_w": xavier(ks[2], Ce, Cf, 1, 1),
        "conv3_b": jnp.zeros((Ce,), jnp.float32),
        # Inference-mode BatchNorm params (non-trivial so folding is exercised).
        "bn1_gamma": jax.random.uniform(ks[3], (Cf,), jnp.float32, 0.8, 1.2),
        "bn1_beta": 0.1 * jax.random.normal(ks[4], (Cf,), jnp.float32),
        "bn1_mean": 0.1 * jax.random.normal(ks[5], (Cf,), jnp.float32),
        "bn1_var": jax.random.uniform(ks[6], (Cf,), jnp.float32, 0.5, 1.5),
        "bn2_gamma": jax.random.uniform(ks[7], (Cf,), jnp.float32, 0.8, 1.2),
        "bn2_beta": 0.1 * jax.random.normal(ks[8], (Cf,), jnp.float32),
        "bn2_mean": 0.1 * jax.random.normal(ks[9], (Cf,), jnp.float32),
        "bn2_var": jax.random.uniform(ks[10], (Cf,), jnp.float32, 0.5, 1.5),
        "eps": 1e-5,
    }


def fold_params(raw):
    """Fold inference-mode BN + biases into kernel-layout (channel-major) weights."""
    eps = raw["eps"]
    s1 = raw["bn1_gamma"] / jnp.sqrt(raw["bn1_var"] + eps)
    t1 = raw["bn1_beta"] - raw["bn1_mean"] * s1
    s2 = raw["bn2_gamma"] / jnp.sqrt(raw["bn2_var"] + eps)
    t2 = raw["bn2_beta"] - raw["bn2_mean"] * s2

    Cf = raw["conv2_w"].shape[0]

    w1 = raw["conv1_w"][:, :, 0, 0] * s1[:, None]            # (Cf, Cin)
    b1 = (raw["conv1_b"] * s1 + t1)[:, None]                 # (Cf, 1)

    # (Cf_out, Cf_in, 3, 3) -> (dy, dx, cout, cin) -> (9, Cf, Cf); BN2 on cout rows.
    w2 = (jnp.transpose(raw["conv2_w"], (2, 3, 0, 1)).reshape(9, Cf, Cf)
          * s2[None, :, None])                               # (9, Cf, Cf)
    b2 = (raw["conv2_b"] * s2 + t2)[:, None]                 # (Cf, 1)

    w3 = raw["conv3_w"][:, :, 0, 0]                          # (Cout, Cf)
    b3 = raw["conv3_b"][:, None]                             # (Cout, 1)
    return (w1, b1, w2, b2, w3, b3)


# ----------------------------------------------------------------------------
# Plain-JAX reference (unfolded conv + BN + ReLU) for a correctness check.
# ----------------------------------------------------------------------------
def _bn_ref(x, gamma, beta, mean, var, eps):
    return (x - mean) / jnp.sqrt(var + eps) * gamma + beta


def reference_forward(x_nchw, raw):
    eps = raw["eps"]
    x = jnp.transpose(x_nchw, (0, 2, 3, 1))                      # NHWC
    H, W = x.shape[1], x.shape[2]

    h = jnp.einsum("nhwc,fc->nhwf", x, raw["conv1_w"][:, :, 0, 0]) + raw["conv1_b"]
    h = jnp.maximum(_bn_ref(h, raw["bn1_gamma"], raw["bn1_beta"],
                            raw["bn1_mean"], raw["bn1_var"], eps), 0.0)

    hp = jnp.pad(h, ((0, 0), (1, 1), (1, 1), (0, 0)))
    acc = jnp.zeros_like(h)
    for dy in range(3):
        for dx in range(3):
            acc = acc + jnp.einsum("nhwc,oc->nhwo",
                                   hp[:, dy:dy + H, dx:dx + W, :],
                                   raw["conv2_w"][:, :, dy, dx])
    h = acc + raw["conv2_b"]
    h = jnp.maximum(_bn_ref(h, raw["bn2_gamma"], raw["bn2_beta"],
                            raw["bn2_mean"], raw["bn2_var"], eps), 0.0)

    out = jnp.einsum("nhwc,oc->nhwo", h, raw["conv3_w"][:, :, 0, 0]) + raw["conv3_b"]
    return jnp.transpose(out, (0, 3, 1, 2))                      # NCHW


if __name__ == "__main__":
    embed_dim = 4
    dim_feedforward = 32
    N, H, W = 2, 16, 16

    key = jax.random.PRNGKey(0)
    kx, kp = jax.random.split(key)
    x = jax.random.normal(kx, (N, embed_dim, H, W), jnp.float32)   # NCHW, like PyTorch

    raw = make_raw_params(kp, embed_dim, dim_feedforward)
    folded = fold_params(raw)

    out = mlp_bottleneck_forward(x, folded)
    out = jax.block_until_ready(out)

    ref = reference_forward(x, raw)
    assert out.shape == (N, embed_dim, H, W)
    max_err = jnp.max(jnp.abs(out - ref))
    assert jnp.allclose(out, ref, atol=2e-4, rtol=2e-4), (
        f"mismatch vs reference (max |err| = {max_err})")

    print("KERNEL_OK")
</pallas_src>

<mosaic_0001>
module attributes {stable_mosaic.version = 11 : i64} {
  func.func @_bottleneck_kernel(%arg0: i32, %arg1: memref<1x4x256xf32, #tpu.memory_space<vmem>>, %arg2: memref<9x256xf32, #tpu.memory_space<vmem>>, %arg3: memref<32x4xf32, #tpu.memory_space<vmem>>, %arg4: memref<32x1xf32, #tpu.memory_space<vmem>>, %arg5: memref<9x32x32xf32, #tpu.memory_space<vmem>>, %arg6: memref<32x1xf32, #tpu.memory_space<vmem>>, %arg7: memref<4x32xf32, #tpu.memory_space<vmem>>, %arg8: memref<4x1xf32, #tpu.memory_space<vmem>>, %arg9: memref<1x4x256xf32, #tpu.memory_space<vmem>>) attributes {dimension_semantics = [#tpu.dimension_semantics<parallel>], iteration_bounds = array<i64: 2>, scalar_prefetch = 0 : i64, scratch_operands = 0 : i64, tpu.core_type = #tpu.core_type<tc>, window_params = [{transform_indices = @transform_0, window_bounds = array<i64: 1, 4, 256>}, {pipeline_mode = #tpu.pipeline_mode<synchronous>, transform_indices = @transform_1, window_bounds = array<i64: 9, 256>}, {pipeline_mode = #tpu.pipeline_mode<synchronous>, transform_indices = @transform_2, window_bounds = array<i64: 32, 4>}, {pipeline_mode = #tpu.pipeline_mode<synchronous>, transform_indices = @transform_3, window_bounds = array<i64: 32, 1>}, {pipeline_mode = #tpu.pipeline_mode<synchronous>, transform_indices = @transform_4, window_bounds = array<i64: 9, 32, 32>}, {pipeline_mode = #tpu.pipeline_mode<synchronous>, transform_indices = @transform_5, window_bounds = array<i64: 32, 1>}, {pipeline_mode = #tpu.pipeline_mode<synchronous>, transform_indices = @transform_6, window_bounds = array<i64: 4, 32>}, {pipeline_mode = #tpu.pipeline_mode<synchronous>, transform_indices = @transform_7, window_bounds = array<i64: 4, 1>}, {transform_indices = @transform_8, window_bounds = array<i64: 1, 4, 256>}]} {
    %c0 = arith.constant 0 : index
    %c0_0 = arith.constant 0 : index
    %c0_1 = arith.constant 0 : index
    %0 = vector.load %arg1[%c0, %c0_0, %c0_1] : memref<1x4x256xf32, #tpu.memory_space<vmem>>, vector<1x4x256xf32>
    %1 = vector.shape_cast %0 : vector<1x4x256xf32> to vector<4x256xf32>
    %c0_2 = arith.constant 0 : index
    %c0_3 = arith.constant 0 : index
    %2 = vector.load %arg3[%c0_2, %c0_3] : memref<32x4xf32, #tpu.memory_space<vmem>>, vector<32x4xf32>
    %cst = arith.constant dense<0.000000e+00> : vector<32x256xf32>
    %3 = tpu.matmul %2, %1, %cst {dimension_numbers = #tpu.dot_dimension_numbers<[1], [0], [0], [1], [0, 0, 1, 1], [], []>} : vector<32x4xf32>, vector<4x256xf32>, vector<32x256xf32> -> vector<32x256xf32>
    %c0_4 = arith.constant 0 : index
    %c0_5 = arith.constant 0 : index
    %4 = vector.load %arg4[%c0_4, %c0_5] : memref<32x1xf32, #tpu.memory_space<vmem>>, vector<32x1xf32>
    %5 = vector.broadcast %4 : vector<32x1xf32> to vector<32x256xf32>
    %6 = arith.addf %3, %5 : vector<32x256xf32>
    %cst_6 = arith.constant 0.000000e+00 : f32
    %7 = vector.broadcast %cst_6 : f32 to vector<32x256xf32>
    %8 = arith.maximumf %6, %7 : vector<32x256xf32>
    %c17_i32 = arith.constant 17 : i32
    %9 = tpu.dynamic_rotate %8 by %c17_i32 dim 1 : vector<32x256xf32>, i32 -> vector<32x256xf32>
    %c0_7 = arith.constant 0 : index
    %c0_8 = arith.constant 0 : index
    %10 = vector.load %arg2[%c0_7, %c0_8] : memref<9x256xf32, #tpu.memory_space<vmem>>, vector<1x256xf32>
    %11 = vector.broadcast %10 : vector<1x256xf32> to vector<32x256xf32>
    %12 = arith.mulf %9, %11 : vector<32x256xf32>
    %c0_9 = arith.constant 0 : index
    %c0_10 = arith.constant 0 : index
    %c0_11 = arith.constant 0 : index
    %13 = vector.load %arg5[%c0_9, %c0_10, %c0_11] : memref<9x32x32xf32, #tpu.memory_space<vmem>>, vector<1x32x32xf32>
    %14 = vector.shape_cast %13 : vector<1x32x32xf32> to vector<32x32xf32>
    %cst_12 = arith.constant dense<0.000000e+00> : vector<32x256xf32>
    %15 = tpu.matmul %14, %12, %cst_12 {dimension_numbers = #tpu.dot_dimension_numbers<[1], [0], [0], [1], [0, 0, 1, 1], [], []>} : vector<32x32xf32>, vector<32x256xf32>, vector<32x256xf32> -> vector<32x256xf32>
    %c16_i32 = arith.constant 16 : i32
    %16 = tpu.dynamic_rotate %8 by %c16_i32 dim 1 : vector<32x256xf32>, i32 -> vector<32x256xf32>
    %c1 = arith.constant 1 : index
    %c0_13 = arith.constant 0 : index
    %17 = vector.load %arg2[%c1, %c0_13] : memref<9x256xf32, #tpu.memory_space<vmem>>, vector<1x256xf32>
    %18 = vector.broadcast %17 : vector<1x256xf32> to vector<32x256xf32>
    %19 = arith.mulf %16, %18 : vector<32x256xf32>
    %c1_14 = arith.constant 1 : index
    %c0_15 = arith.constant 0 : index
    %c0_16 = arith.constant 0 : index
    %20 = vector.load %arg5[%c1_14, %c0_15, %c0_16] : memref<9x32x32xf32, #tpu.memory_space<vmem>>, vector<1x32x32xf32>
    %21 = vector.shape_cast %20 : vector<1x32x32xf32> to vector<32x32xf32>
    %cst_17 = arith.constant dense<0.000000e+00> : vector<32x256xf32>
    %22 = tpu.matmul %21, %19, %cst_17 {dimension_numbers = #tpu.dot_dimension_numbers<[1], [0], [0], [1], [0, 0, 1, 1], [], []>} : vector<32x32xf32>, vector<32x256xf32>, vector<32x256xf32> -> vector<32x256xf32>
    %23 = arith.addf %15, %22 : vector<32x256xf32>
    %c15_i32 = arith.constant 15 : i32
    %24 = tpu.dynamic_rotate %8 by %c15_i32 dim 1 : vector<32x256xf32>, i32 -> vector<32x256xf32>
    %c2 = arith.constant 2 : index
    %c0_18 = arith.constant 0 : index
    %25 = vector.load %arg2[%c2, %c0_18] : memref<9x256xf32, #tpu.memory_space<vmem>>, vector<1x256xf32>
    %26 = vector.broadcast %25 : vector<1x256xf32> to vector<32x256xf32>
    %27 = arith.mulf %24, %26 : vector<32x256xf32>
    %c2_19 = arith.constant 2 : index
    %c0_20 = arith.constant 0 : index
    %c0_21 = arith.constant 0 : index
    %28 = vector.load %arg5[%c2_19, %c0_20, %c0_21] : memref<9x32x32xf32, #tpu.memory_space<vmem>>, vector<1x32x32xf32>
    %29 = vector.shape_cast %28 : vector<1x32x32xf32> to vector<32x32xf32>
    %cst_22 = arith.constant dense<0.000000e+00> : vector<32x256xf32>
    %30 = tpu.matmul %29, %27, %cst_22 {dimension_numbers = #tpu.dot_dimension_numbers<[1], [0], [0], [1], [0, 0, 1, 1], [], []>} : vector<32x32xf32>, vector<32x256xf32>, vector<32x256xf32> -> vector<32x256xf32>
    %31 = arith.addf %23, %30 : vector<32x256xf32>
    %c1_i32 = arith.constant 1 : i32
    %32 = tpu.dynamic_rotate %8 by %c1_i32 dim 1 : vector<32x256xf32>, i32 -> vector<32x256xf32>
    %c3 = arith.constant 3 : index
    %c0_23 = arith.constant 0 : index
    %33 = vector.load %arg2[%c3, %c0_23] : memref<9x256xf32, #tpu.memory_space<vmem>>, vector<1x256xf32>
    %34 = vector.broadcast %33 : vector<1x256xf32> to vector<32x256xf32>
    %35 = arith.mulf %32, %34 : vector<32x256xf32>
    %c3_24 = arith.constant 3 : index
    %c0_25 = arith.constant 0 : index
    %c0_26 = arith.constant 0 : index
    %36 = vector.load %arg5[%c3_24, %c0_25, %c0_26] : memref<9x32x32xf32, #tpu.memory_space<vmem>>, vector<1x32x32xf32>
    %37 = vector.shape_cast %36 : vector<1x32x32xf32> to vector<32x32xf32>
    %cst_27 = arith.constant dense<0.000000e+00> : vector<32x256xf32>
    %38 = tpu.matmul %37, %35, %cst_27 {dimension_numbers = #tpu.dot_dimension_numbers<[1], [0], [0], [1], [0, 0, 1, 1], [], []>} : vector<32x32xf32>, vector<32x256xf32>, vector<32x256xf32> -> vector<32x256xf32>
    %39 = arith.addf %31, %38 : vector<32x256xf32>
    %c4 = arith.constant 4 : index
    %c0_28 = arith.constant 0 : index
    %c0_29 = arith.constant 0 : index
    %40 = vector.load %arg5[%c4, %c0_28, %c0_29] : memref<9x32x32xf32, #tpu.memory_space<vmem>>, vector<1x32x32xf32>
    %41 = vector.shape_cast %40 : vector<1x32x32xf32> to vector<32x32xf32>
    %cst_30 = arith.constant dense<0.000000e+00> : vector<32x256xf32>
    %42 = tpu.matmul %41, %8, %cst_30 {dimension_numbers = #tpu.dot_dimension_numbers<[1], [0], [0], [1], [0, 0, 1, 1], [], []>} : vector<32x32xf32>, vector<32x256xf32>, vector<32x256xf32> -> vector<32x256xf32>
    %43 = arith.addf %39, %42 : vector<32x256xf32>
    %c255_i32 = arith.constant 255 : i32
    %44 = tpu.dynamic_rotate %8 by %c255_i32 dim 1 : vector<32x256xf32>, i32 -> vector<32x256xf32>
    %c5 = arith.constant 5 : index
    %c0_31 = arith.constant 0 : index
    %45 = vector.load %arg2[%c5, %c0_31] : memref<9x256xf32, #tpu.memory_space<vmem>>, vector<1x256xf32>
    %46 = vector.broadcast %45 : vector<1x256xf32> to vector<32x256xf32>
    %47 = arith.mulf %44, %46 : vector<32x256xf32>
    %c5_32 = arith.constant 5 : index
    %c0_33 = arith.constant 0 : index
    %c0_34 = arith.constant 0 : index
    %48 = vector.load %arg5[%c5_32, %c0_33, %c0_34] : memref<9x32x32xf32, #tpu.memory_space<vmem>>, vector<1x32x32xf32>
    %49 = vector.shape_cast %48 : vector<1x32x32xf32> to vector<32x32xf32>
    %cst_35 = arith.constant dense<0.000000e+00> : vector<32x256xf32>
    %50 = tpu.matmul %49, %47, %cst_35 {dimension_numbers = #tpu.dot_dimension_numbers<[1], [0], [0], [1], [0, 0, 1, 1], [], []>} : vector<32x32xf32>, vector<32x256xf32>, vector<32x256xf32> -> vector<32x256xf32>
    %51 = arith.addf %43, %50 : vector<32x256xf32>
    %c241_i32 = arith.constant 241 : i32
    %52 = tpu.dynamic_rotate %8 by %c241_i32 dim 1 : vector<32x256xf32>, i32 -> vector<32x256xf32>
    %c6 = arith.constant 6 : index
    %c0_36 = arith.constant 0 : index
    %53 = vector.load %arg2[%c6, %c0_36] : memref<9x256xf32, #tpu.memory_space<vmem>>, vector<1x256xf32>
    %54 = vector.broadcast %53 : vector<1x256xf32> to vector<32x256xf32>
    %55 = arith.mulf %52, %54 : vector<32x256xf32>
    %c6_37 = arith.constant 6 : index
    %c0_38 = arith.constant 0 : index
    %c0_39 = arith.constant 0 : index
    %56 = vector.load %arg5[%c6_37, %c0_38, %c0_39] : memref<9x32x32xf32, #tpu.memory_space<vmem>>, vector<1x32x32xf32>
    %57 = vector.shape_cast %56 : vector<1x32x32xf32> to vector<32x32xf32>
    %cst_40 = arith.constant dense<0.000000e+00> : vector<32x256xf32>
    %58 = tpu.matmul %57, %55, %cst_40 {dimension_numbers = #tpu.dot_dimension_numbers<[1], [0], [0], [1], [0, 0, 1, 1], [], []>} : vector<32x32xf32>, vector<32x256xf32>, vector<32x256xf32> -> vector<32x256xf32>
    %59 = arith.addf %51, %58 : vector<32x256xf32>
    %c240_i32 = arith.constant 240 : i32
    %60 = tpu.dynamic_rotate %8 by %c240_i32 dim 1 : vector<32x256xf32>, i32 -> vector<32x256xf32>
    %c7 = arith.constant 7 : index
    %c0_41 = arith.constant 0 : index
    %61 = vector.load %arg2[%c7, %c0_41] : memref<9x256xf32, #tpu.memory_space<vmem>>, vector<1x256xf32>
    %62 = vector.broadcast %61 : vector<1x256xf32> to vector<32x256xf32>
    %63 = arith.mulf %60, %62 : vector<32x256xf32>
    %c7_42 = arith.constant 7 : index
    %c0_43 = arith.constant 0 : index
    %c0_44 = arith.constant 0 : index
    %64 = vector.load %arg5[%c7_42, %c0_43, %c0_44] : memref<9x32x32xf32, #tpu.memory_space<vmem>>, vector<1x32x32xf32>
    %65 = vector.shape_cast %64 : vector<1x32x32xf32> to vector<32x32xf32>
    %cst_45 = arith.constant dense<0.000000e+00> : vector<32x256xf32>
    %66 = tpu.matmul %65, %63, %cst_45 {dimension_numbers = #tpu.dot_dimension_numbers<[1], [0], [0], [1], [0, 0, 1, 1], [], []>} : vector<32x32xf32>, vector<32x256xf32>, vector<32x256xf32> -> vector<32x256xf32>
    %67 = arith.addf %59, %66 : vector<32x256xf32>
    %c239_i32 = arith.constant 239 : i32
    %68 = tpu.dynamic_rotate %8 by %c239_i32 dim 1 : vector<32x256xf32>, i32 -> vector<32x256xf32>
    %c8 = arith.constant 8 : index
    %c0_46 = arith.constant 0 : index
    %69 = vector.load %arg2[%c8, %c0_46] : memref<9x256xf32, #tpu.memory_space<vmem>>, vector<1x256xf32>
    %70 = vector.broadcast %69 : vector<1x256xf32> to vector<32x256xf32>
    %71 = arith.mulf %68, %70 : vector<32x256xf32>
    %c8_47 = arith.constant 8 : index
    %c0_48 = arith.constant 0 : index
    %c0_49 = arith.constant 0 : index
    %72 = vector.load %arg5[%c8_47, %c0_48, %c0_49] : memref<9x32x32xf32, #tpu.memory_space<vmem>>, vector<1x32x32xf32>
    %73 = vector.shape_cast %72 : vector<1x32x32xf32> to vector<32x32xf32>
    %cst_50 = arith.constant dense<0.000000e+00> : vector<32x256xf32>
    %74 = tpu.matmul %73, %71, %cst_50 {dimension_numbers = #tpu.dot_dimension_numbers<[1], [0], [0], [1], [0, 0, 1, 1], [], []>} : vector<32x32xf32>, vector<32x256xf32>, vector<32x256xf32> -> vector<32x256xf32>
    %75 = arith.addf %67, %74 : vector<32x256xf32>
    %c0_51 = arith.constant 0 : index
    %c0_52 = arith.constant 0 : index
    %76 = vector.load %arg6[%c0_51, %c0_52] : memref<32x1xf32, #tpu.memory_space<vmem>>, vector<32x1xf32>
    %77 = vector.broadcast %76 : vector<32x1xf32> to vector<32x256xf32>
    %78 = arith.addf %75, %77 : vector<32x256xf32>
    %cst_53 = arith.constant 0.000000e+00 : f32
    %79 = vector.broadcast %cst_53 : f32 to vector<32x256xf32>
    %80 = arith.maximumf %78, %79 : vector<32x256xf32>
    %c0_54 = arith.constant 0 : index
    %c0_55 = arith.constant 0 : index
    %81 = vector.load %arg7[%c0_54, %c0_55] : memref<4x32xf32, #tpu.memory_space<vmem>>, vector<4x32xf32>
    %cst_56 = arith.constant dense<0.000000e+00> : vector<4x256xf32>
    %82 = tpu.matmul %81, %80, %cst_56 {dimension_numbers = #tpu.dot_dimension_numbers<[1], [0], [0], [1], [0, 0, 1, 1], [], []>} : vector<4x32xf32>, vector<32x256xf32>, vector<4x256xf32> -> vector<4x256xf32>
    %c0_57 = arith.constant 0 : index
    %c0_58 = arith.constant 0 : index
    %83 = vector.load %arg8[%c0_57, %c0_58] : memref<4x1xf32, #tpu.memory_space<vmem>>, vector<4x1xf32>
    %84 = vector.broadcast %83 : vector<4x1xf32> to vector<4x256xf32>
    %85 = arith.addf %82, %84 : vector<4x256xf32>
    %c0_59 = arith.constant 0 : index
    %c0_60 = arith.constant 0 : index
    %c0_61 = arith.constant 0 : index
    %86 = vector.load %arg9[%c0_59, %c0_60, %c0_61] : memref<1x4x256xf32, #tpu.memory_space<vmem>>, vector<1x4x256xf32>
    %87 = vector.shape_cast %86 : vector<1x4x256xf32> to vector<4x256xf32>
    %88 = vector.shape_cast %85 : vector<4x256xf32> to vector<1x4x256xf32>
    tpu.vector_store %arg9[%c0_59, %c0_60, %c0_61], %88 {strides = array<i32>} : memref<1x4x256xf32, #tpu.memory_space<vmem>>, vector<1x4x256xf32>,
    return
  }
  func.func @transform_0(%arg0: i32) -> (i32, i32, i32) {
    %c0_i32 = arith.constant 0 : i32
    %c0_i32_0 = arith.constant 0 : i32
    %c0_i32_1 = arith.constant 0 : i32
    return %arg0, %c0_i32, %c0_i32_0 : i32, i32, i32
  }
  func.func @transform_1(%arg0: i32) -> (i32, i32) {
    %c0_i32 = arith.constant 0 : i32
    %c0_i32_0 = arith.constant 0 : i32
    %c0_i32_1 = arith.constant 0 : i32
    return %c0_i32, %c0_i32_0 : i32, i32
  }
  func.func @transform_2(%arg0: i32) -> (i32, i32) {
    %c0_i32 = arith.constant 0 : i32
    %c0_i32_0 = arith.constant 0 : i32
    %c0_i32_1 = arith.constant 0 : i32
    return %c0_i32, %c0_i32_0 : i32, i32
  }
  func.func @transform_3(%arg0: i32) -> (i32, i32) {
    %c0_i32 = arith.constant 0 : i32
    %c0_i32_0 = arith.constant 0 : i32
    %c0_i32_1 = arith.constant 0 : i32
    return %c0_i32, %c0_i32_0 : i32, i32
  }
  func.func @transform_4(%arg0: i32) -> (i32, i32, i32) {
    %c0_i32 = arith.constant 0 : i32
    %c0_i32_0 = arith.constant 0 : i32
    %c0_i32_1 = arith.constant 0 : i32
    %c0_i32_2 = arith.constant 0 : i32
    return %c0_i32, %c0_i32_0, %c0_i32_1 : i32, i32, i32
  }
  func.func @transform_5(%arg0: i32) -> (i32, i32) {
    %c0_i32 = arith.constant 0 : i32
    %c0_i32_0 = arith.constant 0 : i32
    %c0_i32_1 = arith.constant 0 : i32
    return %c0_i32, %c0_i32_0 : i32, i32
  }
  func.func @transform_6(%arg0: i32) -> (i32, i32) {
    %c0_i32 = arith.constant 0 : i32
    %c0_i32_0 = arith.constant 0 : i32
    %c0_i32_1 = arith.constant 0 : i32
    return %c0_i32, %c0_i32_0 : i32, i32
  }
  func.func @transform_7(%arg0: i32) -> (i32, i32) {
    %c0_i32 = arith.constant 0 : i32
    %c0_i32_0 = arith.constant 0 : i32
    %c0_i32_1 = arith.constant 0 : i32
    return %c0_i32, %c0_i32_0 : i32, i32
  }
  func.func @transform_8(%arg0: i32) -> (i32, i32, i32) {
    %c0_i32 = arith.constant 0 : i32
    %c0_i32_0 = arith.constant 0 : i32
    %c0_i32_1 = arith.constant 0 : i32
    return %arg0, %c0_i32, %c0_i32_0 : i32, i32, i32
  }
}

</mosaic_0001>

<llo_original>
// kernel: tpu_custom_call.1
$region0: #{tpu_custom_call.1}
  #allocation0 [shape = 'u32[]', space=smem, size = 0x4, offset = 0x4, fixed_abs, tag = 'smem constant byte address 0x4 - core index']
  #allocation1 [shape = 'u32[72,128]{1,0:T(1,128)}', space=vmem, size = 0x9000, scoped, tag = 'internal scratch']
  %s0 = inlined_call_operand.vmem [shape: f32[2,4,256], index: 0, kind: input, shape index: {}]
  %s1 = inlined_call_operand.vmem [shape: f32[9,256], index: 1, kind: input, shape index: {}]
  %s2 = inlined_call_operand.vmem [shape: f32[32,4], index: 2, kind: input, shape index: {}]
  %s3 = inlined_call_operand.vmem [shape: f32[32,1], index: 3, kind: input, shape index: {}]
  %s4 = inlined_call_operand.hbm [shape: f32[9,32,32], index: 4, kind: input, shape index: {}]
  %s5 = inlined_call_operand.vmem [shape: f32[32,1], index: 5, kind: input, shape index: {}]
  %s6 = inlined_call_operand.vmem [shape: f32[4,32], index: 6, kind: input, shape index: {}]
  %s7 = inlined_call_operand.vmem [shape: f32[4,1], index: 7, kind: input, shape index: {}]
  %s8 = inlined_call_operand.hbm [shape: f32[2,4,256], index: 8, kind: output, shape index: {}]
  %s9 = sld [smem:[#allocation0]]
  $region69: #{tpu_custom_call.1} parent=0
    _
  %s11 = ssub.s32 1, %s9
  %s12 = scalar_select 0, %s11, %s9
  $region1: #{tpu_custom_call.1} parent=0
    #allocation2 [shape = 'u8[147456]{0}', space=vmem, size = 0x24000, scoped, tag = 'input window, operand 4, single buffered']
    #allocation3 [shape = 's32[2]{0}', space=sflag, size = 0x8, scoped, tag = 'scoped memory for tpu_custom_call.1']
    #allocation4 [shape = 's32[2]{0}', space=sflag, size = 0x8, scoped, tag = 'scoped memory for tpu_custom_call.1']
    #allocation5 [shape = 'u8[8192]{0}', space=vmem, size = 0x2000, scoped, tag = 'output window, operand 0']
    %13 = vsyncpa [#allocation3], 0
    %14 = vsyncpa [#allocation4], 0
    %s15 = scalar_lea.sflag [#allocation4], 1
    %16 = vsyncpa %s15, 0
    loop: start=0, step=1, limit=4
    $region2: #{tpu_custom_call.1} parent=1 // loop_pre_header
      _
    $region3: #{tpu_custom_call.1} parent=1 // loop_header
      %s18 = sphi 0, %s22
      %p19 = scmp.ge.s32.totalorder %s18, 4
      %s28 = sphi 0, %s30
      %s31 = sphi 0, %s28
      %s32 = sphi 0, %s31
      %s48 = sphi 0, %s32
      %s52 = sphi 0, %s52
      %s54 = sphi 0, %s52
      %s55 = sphi 0, %s54
      %s69 = sphi 0, %s55
      %s73 = sphi 0, %s73
      %s75 = sphi 0, %s73
      %s76 = sphi 0, %s75
      %s90 = sphi 0, %s76
      %s94 = sphi 0, %s94
      %s96 = sphi 0, %s94
      %s97 = sphi 0, %s96
      %s111 = sphi 0, %s97
      %s115 = sphi 0, %s115
      %s117 = sphi 0, %s115
      %s118 = sphi 0, %s117
      %s132 = sphi 0, %s118
      %s136 = sphi 0, %s136
      %s138 = sphi 0, %s136
      %s139 = sphi 0, %s138
      %s153 = sphi 0, %s139
      %s157 = sphi 0, %s157
      %s159 = sphi 0, %s157
      %s160 = sphi 0, %s159
      %s174 = sphi 0, %s160
      %s178 = sphi 0, %s178
      %s180 = sphi 0, %s178
      %s181 = sphi 0, %s180
      %s195 = sphi 0, %s181
      %s201 = sphi 0, %s203
      %s204 = sphi 0, %s201
      %s205 = sphi 0, %s204
      %s221 = sphi 0, %s205
    $region4: #{tpu_custom_call.1} parent=1 // loop_header_branch
      %21 = sbr.rel (%p19) target = $region8
    $region5: #{tpu_custom_call.1} parent=1 // loop_body
      %s23 = ssub.s32 %s18, 1
      %s24 = ssub.s32 %s18, 2
      %s25 = sadd.s32 %s18, 1
      %s26 = ssub.s32 %s18, %s25
      %p27 = scmp.eq.s32.totalorder %s26, 0
      %s29 = sadd.s32 %s28, 1
      %s30 = scalar_select %p27, %s28, %s29
      %p33 = pneg %p27
      %p34 = scmp.eq.s32.totalorder %s18, 1
      %p35 = por %p33, %p34
      %p36 = scmp.ne.s32.totalorder %s28, %s31
      %p37 = scmp.eq.s32.totalorder %s18, 0
      %p38 = por %p36, %p37
      %p39 = scmp.ne.s32.totalorder %s28, %s31
      %p40 = scmp.eq.s32.totalorder %s23, 1
      %p41 = por %p39, %p40
      %p42 = scmp.ne.s32.totalorder %s31, %s32
      %p43 = scmp.eq.s32.totalorder %s23, 0
      %p44 = por %p42, %p43
      %p45 = scmp.ne.s32.totalorder %s31, %s32
      %p46 = scmp.eq.s32.totalorder %s24, 1
      %p47 = por %p45, %p46
      %p49 = scmp.ne.s32.totalorder %s32, %s48
      %p50 = scmp.eq.s32.totalorder %s24, 0
      %p51 = por %p49, %p50
      %s53 = sadd.s32 %s52, 1
      %p56 = scmp.eq.s32.totalorder %s18, 1
      %p57 = scmp.ne.s32.totalorder %s52, %s54
      %p58 = scmp.eq.s32.totalorder %s18, 0
      %p59 = por %p57, %p58
      %p60 = scmp.ne.s32.totalorder %s52, %s54
      %p61 = scmp.eq.s32.totalorder %s23, 1
      %p62 = por %p60, %p61
      %p63 = scmp.ne.s32.totalorder %s54, %s55
      %p64 = scmp.eq.s32.totalorder %s23, 0
      %p65 = por %p63, %p64
      %p66 = scmp.ne.s32.totalorder %s54, %s55
      %p67 = scmp.eq.s32.totalorder %s24, 1
      %p68 = por %p66, %p67
      %p70 = scmp.ne.s32.totalorder %s55, %s69
      %p71 = scmp.eq.s32.totalorder %s24, 0
      %p72 = por %p70, %p71
      %s74 = sadd.s32 %s73, 1
      %p77 = scmp.eq.s32.totalorder %s18, 1
      %p78 = scmp.ne.s32.totalorder %s73, %s75
      %p79 = scmp.eq.s32.totalorder %s18, 0
      %p80 = por %p78, %p79
      %p81 = scmp.ne.s32.totalorder %s73, %s75
      %p82 = scmp.eq.s32.totalorder %s23, 1
      %p83 = por %p81, %p82
      %p84 = scmp.ne.s32.totalorder %s75, %s76
      %p85 = scmp.eq.s32.totalorder %s23, 0
      %p86 = por %p84, %p85
      %p87 = scmp.ne.s32.totalorder %s75, %s76
      %p88 = scmp.eq.s32.totalorder %s24, 1
      %p89 = por %p87, %p88
      %p91 = scmp.ne.s32.totalorder %s76, %s90
      %p92 = scmp.eq.s32.totalorder %s24, 0
      %p93 = por %p91, %p92
      %s95 = sadd.s32 %s94, 1
      %p98 = scmp.eq.s32.totalorder %s18, 1
      %p99 = scmp.ne.s32.totalorder %s94, %s96
      %p100 = scmp.eq.s32.totalorder %s18, 0
      %p101 = por %p99, %p100
      %p102 = scmp.ne.s32.totalorder %s94, %s96
      %p103 = scmp.eq.s32.totalorder %s23, 1
      %p104 = por %p102, %p103
      %p105 = scmp.ne.s32.totalorder %s96, %s97
      %p106 = scmp.eq.s32.totalorder %s23, 0
      %p107 = por %p105, %p106
      %p108 = scmp.ne.s32.totalorder %s96, %s97
      %p109 = scmp.eq.s32.totalorder %s24, 1
      %p110 = por %p108, %p109
      %p112 = scmp.ne.s32.totalorder %s97, %s111
      %p113 = scmp.eq.s32.totalorder %s24, 0
      %p114 = por %p112, %p113
      %s116 = sadd.s32 %s115, 1
      %p119 = scmp.eq.s32.totalorder %s18, 1
      %p120 = scmp.ne.s32.totalorder %s115, %s117
      %p121 = scmp.eq.s32.totalorder %s18, 0
      %p122 = por %p120, %p121
      %p123 = scmp.ne.s32.totalorder %s115, %s117
      %p124 = scmp.eq.s32.totalorder %s23, 1
      %p125 = por %p123, %p124
      %p126 = scmp.ne.s32.totalorder %s117, %s118
      %p127 = scmp.eq.s32.totalorder %s23, 0
      %p128 = por %p126, %p127
      %p129 = scmp.ne.s32.totalorder %s117, %s118
      %p130 = scmp.eq.s32.totalorder %s24, 1
      %p131 = por %p129, %p130
      %p133 = scmp.ne.s32.totalorder %s118, %s132
      %p134 = scmp.eq.s32.totalorder %s24, 0
      %p135 = por %p133, %p134
      %s137 = sadd.s32 %s136, 1
      %p140 = scmp.eq.s32.totalorder %s18, 1
      %p141 = scmp.ne.s32.totalorder %s136, %s138
      %p142 = scmp.eq.s32.totalorder %s18, 0
      %p143 = por %p141, %p142
      %p144 = scmp.ne.s32.totalorder %s136, %s138
      %p145 = scmp.eq.s32.totalorder %s23, 1
      %p146 = por %p144, %p145
      %p147 = scmp.ne.s32.totalorder %s138, %s139
      %p148 = scmp.eq.s32.totalorder %s23, 0
      %p149 = por %p147, %p148
      %p150 = scmp.ne.s32.totalorder %s138, %s139
      %p151 = scmp.eq.s32.totalorder %s24, 1
      %p152 = por %p150, %p151
      %p154 = scmp.ne.s32.totalorder %s139, %s153
      %p155 = scmp.eq.s32.totalorder %s24, 0
      %p156 = por %p154, %p155
      %s158 = sadd.s32 %s157, 1
      %p161 = scmp.eq.s32.totalorder %s18, 1
      %p162 = scmp.ne.s32.totalorder %s157, %s159
      %p163 = scmp.eq.s32.totalorder %s18, 0
      %p164 = por %p162, %p163
      %p165 = scmp.ne.s32.totalorder %s157, %s159
      %p166 = scmp.eq.s32.totalorder %s23, 1
      %p167 = por %p165, %p166
      %p168 = scmp.ne.s32.totalorder %s159, %s160
      %p169 = scmp.eq.s32.totalorder %s23, 0
      %p170 = por %p168, %p169
      %p171 = scmp.ne.s32.totalorder %s159, %s160
      %p172 = scmp.eq.s32.totalorder %s24, 1
      %p173 = por %p171, %p172
      %p175 = scmp.ne.s32.totalorder %s160, %s174
      %p176 = scmp.eq.s32.totalorder %s24, 0
      %p177 = por %p175, %p176
      %s179 = sadd.s32 %s178, 1
      %p182 = scmp.eq.s32.totalorder %s18, 1
      %p183 = scmp.ne.s32.totalorder %s178, %s180
      %p184 = scmp.eq.s32.totalorder %s18, 0
      %p185 = por %p183, %p184
      %p186 = scmp.ne.s32.totalorder %s178, %s180
      %p187 = scmp.eq.s32.totalorder %s23, 1
      %p188 = por %p186, %p187
      %p189 = scmp.ne.s32.totalorder %s180, %s181
      %p190 = scmp.eq.s32.totalorder %s23, 0
      %p191 = por %p189, %p190
      %p192 = scmp.ne.s32.totalorder %s180, %s181
      %p193 = scmp.eq.s32.totalorder %s24, 1
      %p194 = por %p192, %p193
      %p196 = scmp.ne.s32.totalorder %s181, %s195
      %p197 = scmp.eq.s32.totalorder %s24, 0
      %p198 = por %p196, %p197
      %s199 = ssub.s32 %s18, %s25
      %p200 = scmp.eq.s32.totalorder %s199, 0
      %s202 = sadd.s32 %s201, 1
      %s203 = scalar_select %p200, %s201, %s202
      %p206 = pneg %p200
      %p207 = scmp.eq.s32.totalorder %s18, 1
      %p208 = por %p206, %p207
      %p209 = scmp.ne.s32.totalorder %s201, %s204
      %p210 = scmp.eq.s32.totalorder %s18, 0
      %p211 = por %p209, %p210
      %p212 = scmp.ne.s32.totalorder %s201, %s204
      %p213 = scmp.eq.s32.totalorder %s23, 1
      %p214 = por %p212, %p213
      %p215 = scmp.ne.s32.totalorder %s204, %s205
      %p216 = scmp.eq.s32.totalorder %s23, 0
      %p217 = por %p215, %p216
      %p218 = scmp.ne.s32.totalorder %s204, %s205
      %p219 = scmp.eq.s32.totalorder %s24, 1
      %p220 = por %p218, %p219
      %p222 = scmp.ne.s32.totalorder %s205, %s221
      %p223 = scmp.eq.s32.totalorder %s24, 0
      %p224 = por %p222, %p223
      %p225 = scmp.le.s32.totalorder 1, %s18
      %p226 = scmp.lt.s32.totalorder %s18, 3
      %p227 = pnand %p225, %p226
      %p228 = pneg %p227
      // Predicated region
      $region9: #{tpu_custom_call.1} parent=5 // pred_check
        _
      $region10: #{tpu_custom_call.1} parent=5 // pred_check_branch
        %230 = sbr.rel (%p227) target = $region12
      $region11: #{tpu_custom_call.1} parent=5 // pred_region
        %s231 = ssub.s32 %s18, 1
        // Predicated region
        $region13: #{tpu_custom_call.1} parent=11 // pred_check
          %p232 = pneg %p65
        $region14: #{tpu_custom_call.1} parent=11 // pred_check_branch
          %234 = sbr.rel (%p232) target = $region16
        $region15: #{tpu_custom_call.1} parent=11 // pred_region
          _
        $region16: #{tpu_custom_call.1} parent=11 // pred_fallthru
          _
        // Predicated region
        $region17: #{tpu_custom_call.1} parent=11 // pred_check
          %p235 = pneg %p86
        $region18: #{tpu_custom_call.1} parent=11 // pred_check_branch
          %237 = sbr.rel (%p235) target = $region20
        $region19: #{tpu_custom_call.1} parent=11 // pred_region
          _
        $region20: #{tpu_custom_call.1} parent=11 // pred_fallthru
          _
        // Predicated region
        $region21: #{tpu_custom_call.1} parent=11 // pred_check
          %p238 = pneg %p107
        $region22: #{tpu_custom_call.1} parent=11 // pred_check_branch
          %240 = sbr.rel (%p238) target = $region24
        $region23: #{tpu_custom_call.1} parent=11 // pred_region
          _
        $region24: #{tpu_custom_call.1} parent=11 // pred_fallthru
          _
        // Predicated region
        $region25: #{tpu_custom_call.1} parent=11 // pred_check
          %p241 = pneg %p128
        $region26: #{tpu_custom_call.1} parent=11 // pred_check_branch
          %243 = sbr.rel (%p241) target = $region28
        $region27: #{tpu_custom_call.1} parent=11 // pred_region
          %245 = vsyncadd [#allocation3], 0
          %s246 = sshll.u32 %s4, 4
          %s247 = int_to_ptr.hbm [resolvable:$true] %s246
          %s248 = sshll.u32 [#allocation2], 4
          %s249 = int_to_ptr.vmem [resolvable:$true] %s248
          %254 = dma.hbm_to_vmem [thread:$0]  %s247, 4608, %s249, [#allocation3], 128, 128, 8
        $region28: #{tpu_custom_call.1} parent=11 // pred_fallthru
          _
        // Predicated region
        $region29: #{tpu_custom_call.1} parent=11 // pred_check
          %p255 = pneg %p149
        $region30: #{tpu_custom_call.1} parent=11 // pred_check_branch
          %257 = sbr.rel (%p255) target = $region32
        $region31: #{tpu_custom_call.1} parent=11 // pred_region
          _
        $region32: #{tpu_custom_call.1} parent=11 // pred_fallthru
          _
        // Predicated region
        $region33: #{tpu_custom_call.1} parent=11 // pred_check
          %p258 = pneg %p170
        $region34: #{tpu_custom_call.1} parent=11 // pred_check_branch
          %260 = sbr.rel (%p258) target = $region36
        $region35: #{tpu_custom_call.1} parent=11 // pred_region
          _
        $region36: #{tpu_custom_call.1} parent=11 // pred_fallthru
          _
        // Predicated region
        $region37: #{tpu_custom_call.1} parent=11 // pred_check
          %p261 = pneg %p191
        $region38: #{tpu_custom_call.1} parent=11 // pred_check_branch
          %263 = sbr.rel (%p261) target = $region40
        $region39: #{tpu_custom_call.1} parent=11 // pred_region
          _
        $region40: #{tpu_custom_call.1} parent=11 // pred_fallthru
          _
      $region12: #{tpu_custom_call.1} parent=5 // pred_fallthru
        _
      %p264 = scmp.lt.s32.totalorder %s18, 2
      // Predicated region
      $region41: #{tpu_custom_call.1} parent=5 // pred_check
        %p265 = pneg %p264
      $region42: #{tpu_custom_call.1} parent=5 // pred_check_branch
        %267 = sbr.rel (%p265) target = $region44
      $region43: #{tpu_custom_call.1} parent=5 // pred_region
        // Predicated region
        $region45: #{tpu_custom_call.1} parent=43 // pred_check
          %p268 = pneg %p38
        $region46: #{tpu_custom_call.1} parent=43 // pred_check_branch
          %270 = sbr.rel (%p268) target = $region48
        $region47: #{tpu_custom_call.1} parent=43 // pred_region
          %p271 = scmp.lt.s32.totalorder %s18, 1
          %s272 = scalar_select %p271, %s18, 1
          %s273 = smul.addr %s272, 2
          %s274 = smul.addr %s273, 4
          %s275 = scalar_lea.vmem %s0, %s274
        $region48: #{tpu_custom_call.1} parent=43 // pred_fallthru
          _
      $region44: #{tpu_custom_call.1} parent=5 // pred_fallthru
        _
      %p276 = scmp.le.s32.totalorder 1, %s18
      %p277 = scmp.lt.s32.totalorder %s18, 3
      %p278 = pnand %p276, %p277
      %p279 = pneg %p278
      // Predicated region
      $region49: #{tpu_custom_call.1} parent=5 // pred_check
        _
      $region50: #{tpu_custom_call.1} parent=5 // pred_check_branch
        %281 = sbr.rel (%p278) target = $region52
      $region51: #{tpu_custom_call.1} parent=5 // pred_region
        %s282 = ssub.s32 %s18, 1
        // Predicated region
        $region53: #{tpu_custom_call.1} parent=51 // pred_check
          %p283 = pneg %p128
        $region54: #{tpu_custom_call.1} parent=51 // pred_check_branch
          %285 = sbr.rel (%p283) target = $region56
        $region55: #{tpu_custom_call.1} parent=51 // pred_region
          %287 = dma.done [#allocation3], 4608
        $region56: #{tpu_custom_call.1} parent=51 // pred_fallthru
          _
        %p288 = scmp.lt.s32.totalorder %s23, 1
        %s289 = scalar_select %p288, %s23, 1
        %s290 = smul.addr %s289, 2
        %s291 = smul.addr %s290, 4
        %s292 = scalar_lea.vmem %s0, %s291
        %p293 = pneg %p44
        %p294 = pneg %p41
        %p295 = pneg %p65
        %p296 = pneg %p62
        %p297 = pneg %p86
        %p298 = pneg %p83
        %p299 = pneg %p107
        %p300 = pneg %p104
        %p301 = pneg %p128
        %p302 = pneg %p125
        %p303 = pneg %p149
        %p304 = pneg %p146
        %p305 = pneg %p170
        %p306 = pneg %p167
        %p307 = pneg %p191
        %p308 = pneg %p188
        %p309 = pneg %p217
        %p310 = pneg %p214
        %s311 = sand.u32 %s204, 1
        %s312 = scalar_lea.sflag [#allocation4], %s311
        %s313 = sand.u32 %s204, 1
        %s314 = smul.addr %s313, 8
        %s315 = scalar_lea.vmem [#allocation5], %s314
        %p316 = scmp.lt.s32.totalorder %s23, 1
        %s317 = scalar_select %p316, %s23, 1
        %s318 = smul.addr %s317, 2
        %s319 = smul.addr %s318, 4
        %s320 = scalar_lea.vmem %s0, %s319
        %v321 = vld [vmem:[%s320] sm:$0xff]
        %v322 = vld [vmem:[%s2] sm:$0xff]
        %v323 = vld [vmem:[%s2 + $0x8] sm:$0xff]
        %v324 = vld [vmem:[%s2 + $0x10] sm:$0xff]
        %v325 = vld [vmem:[%s2 + $0x18] sm:$0xff]
        %v326 = vld [vmem:[%s3] sm:$0xff]
        %v327 = vld [vmem:[%s3 + $0x8] sm:$0xff]
        %v328 = vld [vmem:[%s3 + $0x10] sm:$0xff]
        %v329 = vld [vmem:[%s3 + $0x18] sm:$0xff]
        %331 = vset.pattern.permute.xlu0 0
        %332 = vperm.xlu0 %331, %v326
        %v333 = vpop.permute.xlu0 %332
        %336 = vset.pattern.permute.xlu0 0
        %337 = vperm.xlu0 %336, %v327
        %v338 = vpop.permute.xlu0 %337
        %341 = vset.pattern.permute.xlu0 0
        %342 = vperm.xlu0 %341, %v328
        %v343 = vpop.permute.xlu0 %342
        %346 = vset.pattern.permute.xlu0 0
        %347 = vperm.xlu0 %346, %v329
        %v348 = vpop.permute.xlu0 %347
        %351 = vst [vmem:[#allocation1] ss:$2 sm:$0xff] %v321
        %v352 = vld.sshfl [vmem:[#allocation1] sm:$0xff pattern:$0x75316420]
        %v353 = vld.sshfl [vmem:[#allocation1 + $0x8] sm:$0xff pattern:$0x75316420]
        %vm354 = vcmask 31744
        %v356 = vsel %vm354, %v322, 0
        %v359 = vsel %vm354, %v323, 0
        %v362 = vsel %vm354, %v324, 0
        %v365 = vsel %vm354, %v325, 0
        %vm367 = vcmask 1043456
        %v368 = vsel %vm367, %v352, 0
        %v370 = vsel %vm367, %v353, 0
        %372 = vmatpush.msra.mxu0 0.0
        %373 = vmatpush.msra.mxu0 0.0
        %374 = vmatpush.msra.mxu0 0.0
        %375 = vmatpush.msra.mxu0 0.0
        %376 = vmatpush.msra.mxu0 0.0
        %377 = vmatpush.msra.mxu0 0.0
        %378 = vmatpush.msra.mxu0 0.0
        %379 = vmatpush.msra.mxu0 0.0
        %380 = vmatpush.msra.mxu0 0.0
        %381 = vmatpush.msra.mxu0 0.0
        %382 = vmatpush.msra.mxu0 0.0
        %383 = vmatpush.msra.mxu0 0.0
        %384 = vmatpush.msra.mxu0 0.0
        %385 = vmatpush.msra.mxu0 0.0
        %386 = vmatpush.msra.mxu0 0.0
        %387 = vmatpush.msra.mxu0 %v368
        %388 = vmatmul.f32.gmra.mxu0 %v356
        %v389 = vpop.f32.mrf.mxu0
        %v390 = vadd.f32 %v333, %v389
        %391 = vmatmul.f32.gmra.mxu0 %v359
        %v392 = vpop.f32.mrf.mxu0
        %v393 = vadd.f32 %v338, %v392
        %394 = vmatmul.f32.gmra.mxu0 %v362
        %v395 = vpop.f32.mrf.mxu0
        %v396 = vadd.f32 %v343, %v395
        %397 = vmatmul.f32.gmra.mxu0 %v365
        %v398 = vpop.f32.mrf.mxu0
        %v399 = vadd.f32 %v348, %v398
        %400 = vdwg.mxu0
        %401 = vmatpush.msra.mxu0 0.0
        %402 = vmatpush.msra.mxu0 0.0
        %403 = vmatpush.msra.mxu0 0.0
        %404 = vmatpush.msra.mxu0 0.0
        %405 = vmatpush.msra.mxu0 0.0
        %406 = vmatpush.msra.mxu0 0.0
        %407 = vmatpush.msra.mxu0 0.0
        %408 = vmatpush.msra.mxu0 0.0
        %409 = vmatpush.msra.mxu0 0.0
        %410 = vmatpush.msra.mxu0 0.0
        %411 = vmatpush.msra.mxu0 0.0
        %412 = vmatpush.msra.mxu0 0.0
        %413 = vmatpush.msra.mxu0 0.0
        %414 = vmatpush.msra.mxu0 0.0
        %415 = vmatpush.msra.mxu0 0.0
        %416 = vmatpush.msra.mxu0 %v370
        %417 = vmatmul.f32.gmra.mxu0 %v356
        %v418 = vpop.f32.mrf.mxu0
        %v419 = vadd.f32 %v333, %v418
        %420 = vmatmul.f32.gmra.mxu0 %v359
        %v421 = vpop.f32.mrf.mxu0
        %v422 = vadd.f32 %v338, %v421
        %423 = vmatmul.f32.gmra.mxu0 %v362
        %v424 = vpop.f32.mrf.mxu0
        %v425 = vadd.f32 %v343, %v424
        %426 = vmatmul.f32.gmra.mxu0 %v365
        %v427 = vpop.f32.mrf.mxu0
        %v428 = vadd.f32 %v348, %v427
        %429 = vdwg.mxu0
        %v430 = vmax.f32 %v390, 0.0
        %v431 = vmax.f32 %v419, 0.0
        %v432 = vmax.f32 %v393, 0.0
        %v433 = vmax.f32 %v422, 0.0
        %v434 = vmax.f32 %v396, 0.0
        %v435 = vmax.f32 %v425, 0.0
        %v436 = vmax.f32 %v399, 0.0
        %v437 = vmax.f32 %v428, 0.0
        %438 = vrot.lane.b32.xlu0 %v430, 17
        %v439 = vpop.permute.xlu0 %438
        %440 = vrot.lane.b32.xlu0 %v432, 17
        %v441 = vpop.permute.xlu0 %440
        %442 = vrot.lane.b32.xlu0 %v434, 17
        %v443 = vpop.permute.xlu0 %442
        %444 = vrot.lane.b32.xlu0 %v436, 17
        %v445 = vpop.permute.xlu0 %444
        %446 = vrot.lane.b32.xlu0 %v431, 17
        %v447 = vpop.permute.xlu0 %446
        %448 = vrot.lane.b32.xlu0 %v433, 17
        %v449 = vpop.permute.xlu0 %448
        %450 = vrot.lane.b32.xlu0 %v435, 17
        %v451 = vpop.permute.xlu0 %450
        %452 = vrot.lane.b32.xlu0 %v437, 17
        %v453 = vpop.permute.xlu0 %452
        %v454 = vlaneseq
        %v455 = vand.u32 %v454, 127
        %vm456 = vcmp.lt.s32.totalorder %v455, 17
        %v457 = vsel %vm456, %v439, %v447
        %v458 = vsel %vm456, %v441, %v449
        %v459 = vsel %vm456, %v443, %v451
        %v460 = vsel %vm456, %v445, %v453
        %v461 = vsel %vm456, %v447, %v439
        %v462 = vsel %vm456, %v449, %v441
        %v463 = vsel %vm456, %v451, %v443
        %v464 = vsel %vm456, %v453, %v445
        %v465 = vld [vmem:[%s1] ss:$8 sm:$0x3]
        %v467 = vperm.slane %v465, 0
        %v468 = vperm.slane %v465, 1
        %v471 = vmul.f32 %v461, %v467
        %v472 = vmul.f32 %v457, %v468
        %v473 = vmul.f32 %v462, %v467
        %v474 = vmul.f32 %v458, %v468
        %v475 = vmul.f32 %v463, %v467
        %v476 = vmul.f32 %v459, %v468
        %v477 = vmul.f32 %v464, %v467
        %v478 = vmul.f32 %v460, %v468
        %v479 = vld [vmem:[#allocation2] sm:$0xff]
        %v480 = vld [vmem:[#allocation2 + $0x8] sm:$0xff]
        %v481 = vld [vmem:[#allocation2 + $0x10] sm:$0xff]
        %v482 = vld [vmem:[#allocation2 + $0x18] sm:$0xff]
        %483 = vrot.lane.b32.xlu0 %v430, 16
        %v484 = vpop.permute.xlu0 %483
        %485 = vrot.lane.b32.xlu0 %v432, 16
        %v486 = vpop.permute.xlu0 %485
        %487 = vrot.lane.b32.xlu0 %v434, 16
        %v488 = vpop.permute.xlu0 %487
        %489 = vrot.lane.b32.xlu0 %v436, 16
        %v490 = vpop.permute.xlu0 %489
        %491 = vrot.lane.b32.xlu0 %v431, 16
        %v492 = vpop.permute.xlu0 %491
        %493 = vrot.lane.b32.xlu0 %v433, 16
        %v494 = vpop.permute.xlu0 %493
        %495 = vrot.lane.b32.xlu0 %v435, 16
        %v496 = vpop.permute.xlu0 %495
        %497 = vrot.lane.b32.xlu0 %v437, 16
        %v498 = vpop.permute.xlu0 %497
        %vm499 = vcmp.lt.s32.totalorder %v455, 16
        %v500 = vsel %vm499, %v484, %v492
        %v501 = vsel %vm499, %v486, %v494
        %v502 = vsel %vm499, %v488, %v496
        %v503 = vsel %vm499, %v490, %v498
        %v504 = vsel %vm499, %v492, %v484
        %v505 = vsel %vm499, %v494, %v486
        %v506 = vsel %vm499, %v496, %v488
        %v507 = vsel %vm499, %v498, %v490
        %s508 = scalar_lea.vmem %s1, 1
        %v509 = vld [vmem:[%s508] ss:$8 sm:$0x3]
        %v511 = vperm.slane %v509, 0
        %v512 = vperm.slane %v509, 1
        %v515 = vmul.f32 %v504, %v511
        %v516 = vmul.f32 %v500, %v512
        %v517 = vmul.f32 %v505, %v511
        %v518 = vmul.f32 %v501, %v512
        %v519 = vmul.f32 %v506, %v511
        %v520 = vmul.f32 %v502, %v512
        %v521 = vmul.f32 %v507, %v511
        %v522 = vmul.f32 %v503, %v512
        %s523 = scalar_lea.vmem [#allocation2], 32
        %v524 = vld [vmem:[%s523] sm:$0xff]
        %v525 = vld [vmem:[%s523 + $0x8] sm:$0xff]
        %v526 = vld [vmem:[%s523 + $0x10] sm:$0xff]
        %v527 = vld [vmem:[%s523 + $0x18] sm:$0xff]
        %vm528 = vcmask 261120
        %v530 = vsel %vm528, %v524, 0
        %v533 = vsel %vm528, %v525, 0
        %v536 = vsel %vm528, %v526, 0
        %v539 = vsel %vm528, %v527, 0
        %541 = vmatpush.msra.mxu0 0.0
        %542 = vmatpush.msra.mxu0 0.0
        %543 = vmatpush.msra.mxu0 0.0
        %544 = vmatpush.msra.mxu0 0.0
        %545 = vmatpush.msra.mxu0 0.0
        %546 = vmatpush.msra.mxu0 0.0
        %547 = vmatpush.msra.mxu0 0.0
        %548 = vmatpush.msra.mxu0 0.0
        %549 = vmatpush.msra.mxu0 0.0
        %550 = vmatpush.msra.mxu0 0.0
        %551 = vmatpush.msra.mxu0 0.0
        %552 = vmatpush.msra.mxu0 0.0
        %553 = vmatpush.msra.mxu0 %v521
        %554 = vmatpush.msra.mxu0 %v519
        %555 = vmatpush.msra.mxu0 %v517
        %556 = vmatpush.msra.mxu0 %v515
        %557 = vmatmul.f32.gmra.mxu0 %v530
        %v558 = vpop.f32.mrf.mxu0
        %v559 = vadd.f32 0.0, %v558
        %560 = vmatmul.f32.gmra.mxu0 %v533
        %v561 = vpop.f32.mrf.mxu0
        %v562 = vadd.f32 0.0, %v561
        %563 = vmatmul.f32.gmra.mxu0 %v536
        %v564 = vpop.f32.mrf.mxu0
        %v565 = vadd.f32 0.0, %v564
        %566 = vmatmul.f32.gmra.mxu0 %v539
        %v567 = vpop.f32.mrf.mxu0
        %v568 = vadd.f32 0.0, %v567
        %569 = vdwg.mxu0
        %570 = vmatpush.msra.mxu0 0.0
        %571 = vmatpush.msra.mxu0 0.0
        %572 = vmatpush.msra.mxu0 0.0
        %573 = vmatpush.msra.mxu0 0.0
        %574 = vmatpush.msra.mxu0 0.0
        %575 = vmatpush.msra.mxu0 0.0
        %576 = vmatpush.msra.mxu0 0.0
        %577 = vmatpush.msra.mxu0 0.0
        %578 = vmatpush.msra.mxu0 0.0
        %579 = vmatpush.msra.mxu0 0.0
        %580 = vmatpush.msra.mxu0 0.0
        %581 = vmatpush.msra.mxu0 0.0
        %582 = vmatpush.msra.mxu0 %v522
        %583 = vmatpush.msra.mxu0 %v520
        %584 = vmatpush.msra.mxu0 %v518
        %585 = vmatpush.msra.mxu0 %v516
        %586 = vmatmul.f32.gmra.mxu0 %v530
        %v587 = vpop.f32.mrf.mxu0
        %v588 = vadd.f32 0.0, %v587
        %589 = vmatmul.f32.gmra.mxu0 %v533
        %v590 = vpop.f32.mrf.mxu0
        %v591 = vadd.f32 0.0, %v590
        %592 = vmatmul.f32.gmra.mxu0 %v536
        %v593 = vpop.f32.mrf.mxu0
        %v594 = vadd.f32 0.0, %v593
        %595 = vmatmul.f32.gmra.mxu0 %v539
        %v596 = vpop.f32.mrf.mxu0
        %v597 = vadd.f32 0.0, %v596
        %598 = vdwg.mxu0
        %v600 = vsel %vm528, %v479, 0
        %v603 = vsel %vm528, %v480, 0
        %v606 = vsel %vm528, %v481, 0
        %v609 = vsel %vm528, %v482, 0
        %611 = vmatpush.msra.mxu0 0.0
        %612 = vmatpush.msra.mxu0 0.0
        %613 = vmatpush.msra.mxu0 0.0
        %614 = vmatpush.msra.mxu0 0.0
        %615 = vmatpush.msra.mxu0 0.0
        %616 = vmatpush.msra.mxu0 0.0
        %617 = vmatpush.msra.mxu0 0.0
        %618 = vmatpush.msra.mxu0 0.0
        %619 = vmatpush.msra.mxu0 0.0
        %620 = vmatpush.msra.mxu0 0.0
        %621 = vmatpush.msra.mxu0 0.0
        %622 = vmatpush.msra.mxu0 0.0
        %623 = vmatpush.msra.mxu0 %v477
        %624 = vmatpush.msra.mxu0 %v475
        %625 = vmatpush.msra.mxu0 %v473
        %626 = vmatpush.msra.mxu0 %v471
        %627 = vmatmul.f32.gmra.mxu0 %v600
        %v628 = vpop.f32.mrf.mxu0
        %v629 = vadd.f32 %v559, %v628
        %630 = vmatmul.f32.gmra.mxu0 %v603
        %v631 = vpop.f32.mrf.mxu0
        %v632 = vadd.f32 %v562, %v631
        %633 = vmatmul.f32.gmra.mxu0 %v606
        %v634 = vpop.f32.mrf.mxu0
        %v635 = vadd.f32 %v565, %v634
        %636 = vmatmul.f32.gmra.mxu0 %v609
        %v637 = vpop.f32.mrf.mxu0
        %v638 = vadd.f32 %v568, %v637
        %639 = vdwg.mxu0
        %640 = vmatpush.msra.mxu0 0.0
        %641 = vmatpush.msra.mxu0 0.0
        %642 = vmatpush.msra.mxu0 0.0
        %643 = vmatpush.msra.mxu0 0.0
        %644 = vmatpush.msra.mxu0 0.0
        %645 = vmatpush.msra.mxu0 0.0
        %646 = vmatpush.msra.mxu0 0.0
        %647 = vmatpush.msra.mxu0 0.0
        %648 = vmatpush.msra.mxu0 0.0
        %649 = vmatpush.msra.mxu0 0.0
        %650 = vmatpush.msra.mxu0 0.0
        %651 = vmatpush.msra.mxu0 0.0
        %652 = vmatpush.msra.mxu0 %v478
        %653 = vmatpush.msra.mxu0 %v476
        %654 = vmatpush.msra.mxu0 %v474
        %655 = vmatpush.msra.mxu0 %v472
        %656 = vmatmul.f32.gmra.mxu0 %v600
        %v657 = vpop.f32.mrf.mxu0
        %v658 = vadd.f32 %v588, %v657
        %659 = vmatmul.f32.gmra.mxu0 %v603
        %v660 = vpop.f32.mrf.mxu0
        %v661 = vadd.f32 %v591, %v660
        %662 = vmatmul.f32.gmra.mxu0 %v606
        %v663 = vpop.f32.mrf.mxu0
        %v664 = vadd.f32 %v594, %v663
        %665 = vmatmul.f32.gmra.mxu0 %v609
        %v666 = vpop.f32.mrf.mxu0
        %v667 = vadd.f32 %v597, %v666
        %668 = vdwg.mxu0
        %669 = vrot.lane.b32.xlu0 %v430, 15
        %v670 = vpop.permute.xlu0 %669
        %671 = vrot.lane.b32.xlu0 %v432, 15
        %v672 = vpop.permute.xlu0 %671
        %673 = vrot.lane.b32.xlu0 %v434, 15
        %v674 = vpop.permute.xlu0 %673
        %675 = vrot.lane.b32.xlu0 %v436, 15
        %v676 = vpop.permute.xlu0 %675
        %677 = vrot.lane.b32.xlu0 %v431, 15
        %v678 = vpop.permute.xlu0 %677
        %679 = vrot.lane.b32.xlu0 %v433, 15
        %v680 = vpop.permute.xlu0 %679
        %681 = vrot.lane.b32.xlu0 %v435, 15
        %v682 = vpop.permute.xlu0 %681
        %683 = vrot.lane.b32.xlu0 %v437, 15
        %v684 = vpop.permute.xlu0 %683
        %vm685 = vcmp.lt.s32.totalorder %v455, 15
        %v686 = vsel %vm685, %v670, %v678
        %v687 = vsel %vm685, %v672, %v680
        %v688 = vsel %vm685, %v674, %v682
        %v689 = vsel %vm685, %v676, %v684
        %v690 = vsel %vm685, %v678, %v670
        %v691 = vsel %vm685, %v680, %v672
        %v692 = vsel %vm685, %v682, %v674
        %v693 = vsel %vm685, %v684, %v676
        %s694 = scalar_lea.vmem %s1, 2
        %v695 = vld [vmem:[%s694] ss:$8 sm:$0x3]
        %v697 = vperm.slane %v695, 0
        %v698 = vperm.slane %v695, 1
        %v701 = vmul.f32 %v690, %v697
        %v702 = vmul.f32 %v686, %v698
        %v703 = vmul.f32 %v691, %v697
        %v704 = vmul.f32 %v687, %v698
        %v705 = vmul.f32 %v692, %v697
        %v706 = vmul.f32 %v688, %v698
        %v707 = vmul.f32 %v693, %v697
        %v708 = vmul.f32 %v689, %v698
        %s709 = scalar_lea.vmem [#allocation2], 64
        %v710 = vld [vmem:[%s709] sm:$0xff]
        %v711 = vld [vmem:[%s709 + $0x8] sm:$0xff]
        %v712 = vld [vmem:[%s709 + $0x10] sm:$0xff]
        %v713 = vld [vmem:[%s709 + $0x18] sm:$0xff]
        %v715 = vsel %vm528, %v710, 0
        %v718 = vsel %vm528, %v711, 0
        %v721 = vsel %vm528, %v712, 0
        %v724 = vsel %vm528, %v713, 0
        %726 = vmatpush.msra.mxu0 0.0
        %727 = vmatpush.msra.mxu0 0.0
        %728 = vmatpush.msra.mxu0 0.0
        %729 = vmatpush.msra.mxu0 0.0
        %730 = vmatpush.msra.mxu0 0.0
        %731 = vmatpush.msra.mxu0 0.0
        %732 = vmatpush.msra.mxu0 0.0
        %733 = vmatpush.msra.mxu0 0.0
        %734 = vmatpush.msra.mxu0 0.0
        %735 = vmatpush.msra.mxu0 0.0
        %736 = vmatpush.msra.mxu0 0.0
        %737 = vmatpush.msra.mxu0 0.0
        %738 = vmatpush.msra.mxu0 %v707
        %739 = vmatpush.msra.mxu0 %v705
        %740 = vmatpush.msra.mxu0 %v703
        %741 = vmatpush.msra.mxu0 %v701
        %742 = vmatmul.f32.gmra.mxu0 %v715
        %v743 = vpop.f32.mrf.mxu0
        %v744 = vadd.f32 0.0, %v743
        %745 = vmatmul.f32.gmra.mxu0 %v718
        %v746 = vpop.f32.mrf.mxu0
        %v747 = vadd.f32 0.0, %v746
        %748 = vmatmul.f32.gmra.mxu0 %v721
        %v749 = vpop.f32.mrf.mxu0
        %v750 = vadd.f32 0.0, %v749
        %751 = vmatmul.f32.gmra.mxu0 %v724
        %v752 = vpop.f32.mrf.mxu0
        %v753 = vadd.f32 0.0, %v752
        %754 = vdwg.mxu0
        %755 = vmatpush.msra.mxu0 0.0
        %756 = vmatpush.msra.mxu0 0.0
        %757 = vmatpush.msra.mxu0 0.0
        %758 = vmatpush.msra.mxu0 0.0
        %759 = vmatpush.msra.mxu0 0.0
        %760 = vmatpush.msra.mxu0 0.0
        %761 = vmatpush.msra.mxu0 0.0
        %762 = vmatpush.msra.mxu0 0.0
        %763 = vmatpush.msra.mxu0 0.0
        %764 = vmatpush.msra.mxu0 0.0
        %765 = vmatpush.msra.mxu0 0.0
        %766 = vmatpush.msra.mxu0 0.0
        %767 = vmatpush.msra.mxu0 %v708
        %768 = vmatpush.msra.mxu0 %v706
        %769 = vmatpush.msra.mxu0 %v704
        %770 = vmatpush.msra.mxu0 %v702
        %771 = vmatmul.f32.gmra.mxu0 %v715
        %v772 = vpop.f32.mrf.mxu0
        %v773 = vadd.f32 0.0, %v772
        %774 = vmatmul.f32.gmra.mxu0 %v718
        %v775 = vpop.f32.mrf.mxu0
        %v776 = vadd.f32 0.0, %v775
        %777 = vmatmul.f32.gmra.mxu0 %v721
        %v778 = vpop.f32.mrf.mxu0
        %v779 = vadd.f32 0.0, %v778
        %780 = vmatmul.f32.gmra.mxu0 %v724
        %v781 = vpop.f32.mrf.mxu0
        %v782 = vadd.f32 0.0, %v781
        %783 = vdwg.mxu0
        %v784 = vadd.f32 %v629, %v744
        %v785 = vadd.f32 %v658, %v773
        %v786 = vadd.f32 %v632, %v747
        %v787 = vadd.f32 %v661, %v776
        %v788 = vadd.f32 %v635, %v750
        %v789 = vadd.f32 %v664, %v779
        %v790 = vadd.f32 %v638, %v753
        %v791 = vadd.f32 %v667, %v782
        %792 = vrot.lane.b32.xlu0 %v430, 1
        %v793 = vpop.permute.xlu0 %792
        %794 = vrot.lane.b32.xlu0 %v432, 1
        %v795 = vpop.permute.xlu0 %794
        %796 = vrot.lane.b32.xlu0 %v434, 1
        %v797 = vpop.permute.xlu0 %796
        %798 = vrot.lane.b32.xlu0 %v436, 1
        %v799 = vpop.permute.xlu0 %798
        %800 = vrot.lane.b32.xlu0 %v431, 1
        %v801 = vpop.permute.xlu0 %800
        %802 = vrot.lane.b32.xlu0 %v433, 1
        %v803 = vpop.permute.xlu0 %802
        %804 = vrot.lane.b32.xlu0 %v435, 1
        %v805 = vpop.permute.xlu0 %804
        %806 = vrot.lane.b32.xlu0 %v437, 1
        %v807 = vpop.permute.xlu0 %806
        %vm808 = vcmp.lt.s32.totalorder %v455, 1
        %v809 = vsel %vm808, %v793, %v801
        %v810 = vsel %vm808, %v795, %v803
        %v811 = vsel %vm808, %v797, %v805
        %v812 = vsel %vm808, %v799, %v807
        %v813 = vsel %vm808, %v801, %v793
        %v814 = vsel %vm808, %v803, %v795
        %v815 = vsel %vm808, %v805, %v797
        %v816 = vsel %vm808, %v807, %v799
        %s817 = scalar_lea.vmem %s1, 3
        %v818 = vld [vmem:[%s817] ss:$8 sm:$0x3]
        %v820 = vperm.slane %v818, 0
        %v821 = vperm.slane %v818, 1
        %v824 = vmul.f32 %v813, %v820
        %v825 = vmul.f32 %v809, %v821
        %v826 = vmul.f32 %v814, %v820
        %v827 = vmul.f32 %v810, %v821
        %v828 = vmul.f32 %v815, %v820
        %v829 = vmul.f32 %v811, %v821
        %v830 = vmul.f32 %v816, %v820
        %v831 = vmul.f32 %v812, %v821
        %s832 = scalar_lea.vmem [#allocation2], 96
        %v833 = vld [vmem:[%s832] sm:$0xff]
        %v834 = vld [vmem:[%s832 + $0x8] sm:$0xff]
        %v835 = vld [vmem:[%s832 + $0x10] sm:$0xff]
        %v836 = vld [vmem:[%s832 + $0x18] sm:$0xff]
        %v838 = vsel %vm528, %v833, 0
        %v841 = vsel %vm528, %v834, 0
        %v844 = vsel %vm528, %v835, 0
        %v847 = vsel %vm528, %v836, 0
        %849 = vmatpush.msra.mxu0 0.0
        %850 = vmatpush.msra.mxu0 0.0
        %851 = vmatpush.msra.mxu0 0.0
        %852 = vmatpush.msra.mxu0 0.0
        %853 = vmatpush.msra.mxu0 0.0
        %854 = vmatpush.msra.mxu0 0.0
        %855 = vmatpush.msra.mxu0 0.0
        %856 = vmatpush.msra.mxu0 0.0
        %857 = vmatpush.msra.mxu0 0.0
        %858 = vmatpush.msra.mxu0 0.0
        %859 = vmatpush.msra.mxu0 0.0
        %860 = vmatpush.msra.mxu0 0.0
        %861 = vmatpush.msra.mxu0 %v830
        %862 = vmatpush.msra.mxu0 %v828
        %863 = vmatpush.msra.mxu0 %v826
        %864 = vmatpush.msra.mxu0 %v824
        %865 = vmatmul.f32.gmra.mxu0 %v838
        %v866 = vpop.f32.mrf.mxu0
        %v867 = vadd.f32 0.0, %v866
        %868 = vmatmul.f32.gmra.mxu0 %v841
        %v869 = vpop.f32.mrf.mxu0
        %v870 = vadd.f32 0.0, %v869
        %871 = vmatmul.f32.gmra.mxu0 %v844
        %v872 = vpop.f32.mrf.mxu0
        %v873 = vadd.f32 0.0, %v872
        %874 = vmatmul.f32.gmra.mxu0 %v847
        %v875 = vpop.f32.mrf.mxu0
        %v876 = vadd.f32 0.0, %v875
        %877 = vdwg.mxu0
        %878 = vmatpush.msra.mxu0 0.0
        %879 = vmatpush.msra.mxu0 0.0
        %880 = vmatpush.msra.mxu0 0.0
        %881 = vmatpush.msra.mxu0 0.0
        %882 = vmatpush.msra.mxu0 0.0
        %883 = vmatpush.msra.mxu0 0.0
        %884 = vmatpush.msra.mxu0 0.0
        %885 = vmatpush.msra.mxu0 0.0
        %886 = vmatpush.msra.mxu0 0.0
        %887 = vmatpush.msra.mxu0 0.0
        %888 = vmatpush.msra.mxu0 0.0
        %889 = vmatpush.msra.mxu0 0.0
        %890 = vmatpush.msra.mxu0 %v831
        %891 = vmatpush.msra.mxu0 %v829
        %892 = vmatpush.msra.mxu0 %v827
        %893 = vmatpush.msra.mxu0 %v825
        %894 = vmatmul.f32.gmra.mxu0 %v838
        %v895 = vpop.f32.mrf.mxu0
        %v896 = vadd.f32 0.0, %v895
        %897 = vmatmul.f32.gmra.mxu0 %v841
        %v898 = vpop.f32.mrf.mxu0
        %v899 = vadd.f32 0.0, %v898
        %900 = vmatmul.f32.gmra.mxu0 %v844
        %v901 = vpop.f32.mrf.mxu0
        %v902 = vadd.f32 0.0, %v901
        %903 = vmatmul.f32.gmra.mxu0 %v847
        %v904 = vpop.f32.mrf.mxu0
        %v905 = vadd.f32 0.0, %v904
        %906 = vdwg.mxu0
        %v907 = vadd.f32 %v784, %v867
        %v908 = vadd.f32 %v785, %v896
        %v909 = vadd.f32 %v786, %v870
        %v910 = vadd.f32 %v787, %v899
        %v911 = vadd.f32 %v788, %v873
        %v912 = vadd.f32 %v789, %v902
        %v913 = vadd.f32 %v790, %v876
        %v914 = vadd.f32 %v791, %v905
        %s915 = scalar_lea.vmem [#allocation2], 128
        %v916 = vld [vmem:[%s915] sm:$0xff]
        %v917 = vld [vmem:[%s915 + $0x8] sm:$0xff]
        %v918 = vld [vmem:[%s915 + $0x10] sm:$0xff]
        %v919 = vld [vmem:[%s915 + $0x18] sm:$0xff]
        %v921 = vsel %vm528, %v916, 0
        %v924 = vsel %vm528, %v917, 0
        %v927 = vsel %vm528, %v918, 0
        %v930 = vsel %vm528, %v919, 0
        %932 = vmatpush.msra.mxu0 0.0
        %933 = vmatpush.msra.mxu0 0.0
        %934 = vmatpush.msra.mxu0 0.0
        %935 = vmatpush.msra.mxu0 0.0
        %936 = vmatpush.msra.mxu0 0.0
        %937 = vmatpush.msra.mxu0 0.0
        %938 = vmatpush.msra.mxu0 0.0
        %939 = vmatpush.msra.mxu0 0.0
        %940 = vmatpush.msra.mxu0 0.0
        %941 = vmatpush.msra.mxu0 0.0
        %942 = vmatpush.msra.mxu0 0.0
        %943 = vmatpush.msra.mxu0 0.0
        %944 = vmatpush.msra.mxu0 %v436
        %945 = vmatpush.msra.mxu0 %v434
        %946 = vmatpush.msra.mxu0 %v432
        %947 = vmatpush.msra.mxu0 %v430
        %948 = vmatmul.f32.gmra.mxu0 %v921
        %v949 = vpop.f32.mrf.mxu0
        %v950 = vadd.f32 0.0, %v949
        %951 = vmatmul.f32.gmra.mxu0 %v924
        %v952 = vpop.f32.mrf.mxu0
        %v953 = vadd.f32 0.0, %v952
        %954 = vmatmul.f32.gmra.mxu0 %v927
        %v955 = vpop.f32.mrf.mxu0
        %v956 = vadd.f32 0.0, %v955
        %957 = vmatmul.f32.gmra.mxu0 %v930
        %v958 = vpop.f32.mrf.mxu0
        %v959 = vadd.f32 0.0, %v958
        %960 = vdwg.mxu0
        %961 = vmatpush.msra.mxu0 0.0
        %962 = vmatpush.msra.mxu0 0.0
        %963 = vmatpush.msra.mxu0 0.0
        %964 = vmatpush.msra.mxu0 0.0
        %965 = vmatpush.msra.mxu0 0.0
        %966 = vmatpush.msra.mxu0 0.0
        %967 = vmatpush.msra.mxu0 0.0
        %968 = vmatpush.msra.mxu0 0.0
        %969 = vmatpush.msra.mxu0 0.0
        %970 = vmatpush.msra.mxu0 0.0
        %971 = vmatpush.msra.mxu0 0.0
        %972 = vmatpush.msra.mxu0 0.0
        %973 = vmatpush.msra.mxu0 %v437
        %974 = vmatpush.msra.mxu0 %v435
        %975 = vmatpush.msra.mxu0 %v433
        %976 = vmatpush.msra.mxu0 %v431
        %977 = vmatmul.f32.gmra.mxu0 %v921
        %v978 = vpop.f32.mrf.mxu0
        %v979 = vadd.f32 0.0, %v978
        %980 = vmatmul.f32.gmra.mxu0 %v924
        %v981 = vpop.f32.mrf.mxu0
        %v982 = vadd.f32 0.0, %v981
        %983 = vmatmul.f32.gmra.mxu0 %v927
        %v984 = vpop.f32.mrf.mxu0
        %v985 = vadd.f32 0.0, %v984
        %986 = vmatmul.f32.gmra.mxu0 %v930
        %v987 = vpop.f32.mrf.mxu0
        %v988 = vadd.f32 0.0, %v987
        %989 = vdwg.mxu0
        %v990 = vadd.f32 %v907, %v950
        %v991 = vadd.f32 %v908, %v979
        %v992 = vadd.f32 %v909, %v953
        %v993 = vadd.f32 %v910, %v982
        %v994 = vadd.f32 %v911, %v956
        %v995 = vadd.f32 %v912, %v985
        %v996 = vadd.f32 %v913, %v959
        %v997 = vadd.f32 %v914, %v988
        %998 = vrot.lane.b32.xlu0 %v430, 127
        %v999 = vpop.permute.xlu0 %998
        %1000 = vrot.lane.b32.xlu0 %v432, 127
        %v1001 = vpop.permute.xlu0 %1000
        %1002 = vrot.lane.b32.xlu0 %v434, 127
        %v1003 = vpop.permute.xlu0 %1002
        %1004 = vrot.lane.b32.xlu0 %v436, 127
        %v1005 = vpop.permute.xlu0 %1004
        %1006 = vrot.lane.b32.xlu0 %v431, 127
        %v1007 = vpop.permute.xlu0 %1006
        %1008 = vrot.lane.b32.xlu0 %v433, 127
        %v1009 = vpop.permute.xlu0 %1008
        %1010 = vrot.lane.b32.xlu0 %v435, 127
        %v1011 = vpop.permute.xlu0 %1010
        %1012 = vrot.lane.b32.xlu0 %v437, 127
        %v1013 = vpop.permute.xlu0 %1012
        %vm1014 = vcmp.lt.s32.totalorder %v455, 127
        %v1015 = vsel %vm1014, %v999, %v1007
        %v1016 = vsel %vm1014, %v1001, %v1009
        %v1017 = vsel %vm1014, %v1003, %v1011
        %v1018 = vsel %vm1014, %v1005, %v1013
        %v1019 = vsel %vm1014, %v1007, %v999
        %v1020 = vsel %vm1014, %v1009, %v1001
        %v1021 = vsel %vm1014, %v1011, %v1003
        %v1022 = vsel %vm1014, %v1013, %v1005
        %s1023 = scalar_lea.vmem %s1, 5
        %v1024 = vld [vmem:[%s1023] ss:$8 sm:$0x3]
        %v1026 = vperm.slane %v1024, 0
        %v1027 = vperm.slane %v1024, 1
        %v1030 = vmul.f32 %v1015, %v1026
        %v1031 = vmul.f32 %v1019, %v1027
        %v1032 = vmul.f32 %v1016, %v1026
        %v1033 = vmul.f32 %v1020, %v1027
        %v1034 = vmul.f32 %v1017, %v1026
        %v1035 = vmul.f32 %v1021, %v1027
        %v1036 = vmul.f32 %v1018, %v1026
        %v1037 = vmul.f32 %v1022, %v1027
        %s1038 = scalar_lea.vmem [#allocation2], 160
        %v1039 = vld [vmem:[%s1038] sm:$0xff]
        %v1040 = vld [vmem:[%s1038 + $0x8] sm:$0xff]
        %v1041 = vld [vmem:[%s1038 + $0x10] sm:$0xff]
        %v1042 = vld [vmem:[%s1038 + $0x18] sm:$0xff]
        %v1044 = vsel %vm528, %v1039, 0
        %v1047 = vsel %vm528, %v1040, 0
        %v1050 = vsel %vm528, %v1041, 0
        %v1053 = vsel %vm528, %v1042, 0
        %1055 = vmatpush.msra.mxu0 0.0
        %1056 = vmatpush.msra.mxu0 0.0
        %1057 = vmatpush.msra.mxu0 0.0
        %1058 = vmatpush.msra.mxu0 0.0
        %1059 = vmatpush.msra.mxu0 0.0
        %1060 = vmatpush.msra.mxu0 0.0
        %1061 = vmatpush.msra.mxu0 0.0
        %1062 = vmatpush.msra.mxu0 0.0
        %1063 = vmatpush.msra.mxu0 0.0
        %1064 = vmatpush.msra.mxu0 0.0
        %1065 = vmatpush.msra.mxu0 0.0
        %1066 = vmatpush.msra.mxu0 0.0
        %1067 = vmatpush.msra.mxu0 %v1036
        %1068 = vmatpush.msra.mxu0 %v1034
        %1069 = vmatpush.msra.mxu0 %v1032
        %1070 = vmatpush.msra.mxu0 %v1030
        %1071 = vmatmul.f32.gmra.mxu0 %v1044
        %v1072 = vpop.f32.mrf.mxu0
        %v1073 = vadd.f32 0.0, %v1072
        %1074 = vmatmul.f32.gmra.mxu0 %v1047
        %v1075 = vpop.f32.mrf.mxu0
        %v1076 = vadd.f32 0.0, %v1075
        %1077 = vmatmul.f32.gmra.mxu0 %v1050
        %v1078 = vpop.f32.mrf.mxu0
        %v1079 = vadd.f32 0.0, %v1078
        %1080 = vmatmul.f32.gmra.mxu0 %v1053
        %v1081 = vpop.f32.mrf.mxu0
        %v1082 = vadd.f32 0.0, %v1081
        %1083 = vdwg.mxu0
        %1084 = vmatpush.msra.mxu0 0.0
        %1085 = vmatpush.msra.mxu0 0.0
        %1086 = vmatpush.msra.mxu0 0.0
        %1087 = vmatpush.msra.mxu0 0.0
        %1088 = vmatpush.msra.mxu0 0.0
        %1089 = vmatpush.msra.mxu0 0.0
        %1090 = vmatpush.msra.mxu0 0.0
        %1091 = vmatpush.msra.mxu0 0.0
        %1092 = vmatpush.msra.mxu0 0.0
        %1093 = vmatpush.msra.mxu0 0.0
        %1094 = vmatpush.msra.mxu0 0.0
        %1095 = vmatpush.msra.mxu0 0.0
        %1096 = vmatpush.msra.mxu0 %v1037
        %1097 = vmatpush.msra.mxu0 %v1035
        %1098 = vmatpush.msra.mxu0 %v1033
        %1099 = vmatpush.msra.mxu0 %v1031
        %1100 = vmatmul.f32.gmra.mxu0 %v1044
        %v1101 = vpop.f32.mrf.mxu0
        %v1102 = vadd.f32 0.0, %v1101
        %1103 = vmatmul.f32.gmra.mxu0 %v1047
        %v1104 = vpop.f32.mrf.mxu0
        %v1105 = vadd.f32 0.0, %v1104
        %1106 = vmatmul.f32.gmra.mxu0 %v1050
        %v1107 = vpop.f32.mrf.mxu0
        %v1108 = vadd.f32 0.0, %v1107
        %1109 = vmatmul.f32.gmra.mxu0 %v1053
        %v1110 = vpop.f32.mrf.mxu0
        %v1111 = vadd.f32 0.0, %v1110
        %1112 = vdwg.mxu0
        %v1113 = vadd.f32 %v990, %v1073
        %v1114 = vadd.f32 %v991, %v1102
        %v1115 = vadd.f32 %v992, %v1076
        %v1116 = vadd.f32 %v993, %v1105
        %v1117 = vadd.f32 %v994, %v1079
        %v1118 = vadd.f32 %v995, %v1108
        %v1119 = vadd.f32 %v996, %v1082
        %v1120 = vadd.f32 %v997, %v1111
        %1121 = vrot.lane.b32.xlu0 %v430, 113
        %v1122 = vpop.permute.xlu0 %1121
        %1123 = vrot.lane.b32.xlu0 %v432, 113
        %v1124 = vpop.permute.xlu0 %1123
        %1125 = vrot.lane.b32.xlu0 %v434, 113
        %v1126 = vpop.permute.xlu0 %1125
        %1127 = vrot.lane.b32.xlu0 %v436, 113
        %v1128 = vpop.permute.xlu0 %1127
        %1129 = vrot.lane.b32.xlu0 %v431, 113
        %v1130 = vpop.permute.xlu0 %1129
        %1131 = vrot.lane.b32.xlu0 %v433, 113
        %v1132 = vpop.permute.xlu0 %1131
        %1133 = vrot.lane.b32.xlu0 %v435, 113
        %v1134 = vpop.permute.xlu0 %1133
        %1135 = vrot.lane.b32.xlu0 %v437, 113
        %v1136 = vpop.permute.xlu0 %1135
        %vm1137 = vcmp.lt.s32.totalorder %v455, 113
        %v1138 = vsel %vm1137, %v1122, %v1130
        %v1139 = vsel %vm1137, %v1124, %v1132
        %v1140 = vsel %vm1137, %v1126, %v1134
        %v1141 = vsel %vm1137, %v1128, %v1136
        %v1142 = vsel %vm1137, %v1130, %v1122
        %v1143 = vsel %vm1137, %v1132, %v1124
        %v1144 = vsel %vm1137, %v1134, %v1126
        %v1145 = vsel %vm1137, %v1136, %v1128
        %s1146 = scalar_lea.vmem %s1, 6
        %v1147 = vld [vmem:[%s1146] ss:$8 sm:$0x3]
        %v1149 = vperm.slane %v1147, 0
        %v1150 = vperm.slane %v1147, 1
        %v1153 = vmul.f32 %v1138, %v1149
        %v1154 = vmul.f32 %v1142, %v1150
        %v1155 = vmul.f32 %v1139, %v1149
        %v1156 = vmul.f32 %v1143, %v1150
        %v1157 = vmul.f32 %v1140, %v1149
        %v1158 = vmul.f32 %v1144, %v1150
        %v1159 = vmul.f32 %v1141, %v1149
        %v1160 = vmul.f32 %v1145, %v1150
        %s1161 = scalar_lea.vmem [#allocation2], 192
        %v1162 = vld [vmem:[%s1161] sm:$0xff]
        %v1163 = vld [vmem:[%s1161 + $0x8] sm:$0xff]
        %v1164 = vld [vmem:[%s1161 + $0x10] sm:$0xff]
        %v1165 = vld [vmem:[%s1161 + $0x18] sm:$0xff]
        %v1167 = vsel %vm528, %v1162, 0
        %v1170 = vsel %vm528, %v1163, 0
        %v1173 = vsel %vm528, %v1164, 0
        %v1176 = vsel %vm528, %v1165, 0
        %1178 = vmatpush.msra.mxu0 0.0
        %1179 = vmatpush.msra.mxu0 0.0
        %1180 = vmatpush.msra.mxu0 0.0
        %1181 = vmatpush.msra.mxu0 0.0
        %1182 = vmatpush.msra.mxu0 0.0
        %1183 = vmatpush.msra.mxu0 0.0
        %1184 = vmatpush.msra.mxu0 0.0
        %1185 = vmatpush.msra.mxu0 0.0
        %1186 = vmatpush.msra.mxu0 0.0
        %1187 = vmatpush.msra.mxu0 0.0
        %1188 = vmatpush.msra.mxu0 0.0
        %1189 = vmatpush.msra.mxu0 0.0
        %1190 = vmatpush.msra.mxu0 %v1159
        %1191 = vmatpush.msra.mxu0 %v1157
        %1192 = vmatpush.msra.mxu0 %v1155
        %1193 = vmatpush.msra.mxu0 %v1153
        %1194 = vmatmul.f32.gmra.mxu0 %v1167
        %v1195 = vpop.f32.mrf.mxu0
        %v1196 = vadd.f32 0.0, %v1195
        %1197 = vmatmul.f32.gmra.mxu0 %v1170
        %v1198 = vpop.f32.mrf.mxu0
        %v1199 = vadd.f32 0.0, %v1198
        %1200 = vmatmul.f32.gmra.mxu0 %v1173
        %v1201 = vpop.f32.mrf.mxu0
        %v1202 = vadd.f32 0.0, %v1201
        %1203 = vmatmul.f32.gmra.mxu0 %v1176
        %v1204 = vpop.f32.mrf.mxu0
        %v1205 = vadd.f32 0.0, %v1204
        %1206 = vdwg.mxu0
        %1207 = vmatpush.msra.mxu0 0.0
        %1208 = vmatpush.msra.mxu0 0.0
        %1209 = vmatpush.msra.mxu0 0.0
        %1210 = vmatpush.msra.mxu0 0.0
        %1211 = vmatpush.msra.mxu0 0.0
        %1212 = vmatpush.msra.mxu0 0.0
        %1213 = vmatpush.msra.mxu0 0.0
        %1214 = vmatpush.msra.mxu0 0.0
        %1215 = vmatpush.msra.mxu0 0.0
        %1216 = vmatpush.msra.mxu0 0.0
        %1217 = vmatpush.msra.mxu0 0.0
        %1218 = vmatpush.msra.mxu0 0.0
        %1219 = vmatpush.msra.mxu0 %v1160
        %1220 = vmatpush.msra.mxu0 %v1158
        %1221 = vmatpush.msra.mxu0 %v1156
        %1222 = vmatpush.msra.mxu0 %v1154
        %1223 = vmatmul.f32.gmra.mxu0 %v1167
        %v1224 = vpop.f32.mrf.mxu0
        %v1225 = vadd.f32 0.0, %v1224
        %1226 = vmatmul.f32.gmra.mxu0 %v1170
        %v1227 = vpop.f32.mrf.mxu0
        %v1228 = vadd.f32 0.0, %v1227
        %1229 = vmatmul.f32.gmra.mxu0 %v1173
        %v1230 = vpop.f32.mrf.mxu0
        %v1231 = vadd.f32 0.0, %v1230
        %1232 = vmatmul.f32.gmra.mxu0 %v1176
        %v1233 = vpop.f32.mrf.mxu0
        %v1234 = vadd.f32 0.0, %v1233
        %1235 = vdwg.mxu0
        %v1236 = vadd.f32 %v1113, %v1196
        %v1237 = vadd.f32 %v1114, %v1225
        %v1238 = vadd.f32 %v1115, %v1199
        %v1239 = vadd.f32 %v1116, %v1228
        %v1240 = vadd.f32 %v1117, %v1202
        %v1241 = vadd.f32 %v1118, %v1231
        %v1242 = vadd.f32 %v1119, %v1205
        %v1243 = vadd.f32 %v1120, %v1234
        %1244 = vrot.lane.b32.xlu0 %v430, 112
        %v1245 = vpop.permute.xlu0 %1244
        %1246 = vrot.lane.b32.xlu0 %v432, 112
        %v1247 = vpop.permute.xlu0 %1246
        %1248 = vrot.lane.b32.xlu0 %v434, 112
        %v1249 = vpop.permute.xlu0 %1248
        %1250 = vrot.lane.b32.xlu0 %v436, 112
        %v1251 = vpop.permute.xlu0 %1250
        %1252 = vrot.lane.b32.xlu0 %v431, 112
        %v1253 = vpop.permute.xlu0 %1252
        %1254 = vrot.lane.b32.xlu0 %v433, 112
        %v1255 = vpop.permute.xlu0 %1254
        %1256 = vrot.lane.b32.xlu0 %v435, 112
        %v1257 = vpop.permute.xlu0 %1256
        %1258 = vrot.lane.b32.xlu0 %v437, 112
        %v1259 = vpop.permute.xlu0 %1258
        %vm1260 = vcmp.lt.s32.totalorder %v455, 112
        %v1261 = vsel %vm1260, %v1245, %v1253
        %v1262 = vsel %vm1260, %v1247, %v1255
        %v1263 = vsel %vm1260, %v1249, %v1257
        %v1264 = vsel %vm1260, %v1251, %v1259
        %v1265 = vsel %vm1260, %v1253, %v1245
        %v1266 = vsel %vm1260, %v1255, %v1247
        %v1267 = vsel %vm1260, %v1257, %v1249
        %v1268 = vsel %vm1260, %v1259, %v1251
        %s1269 = scalar_lea.vmem %s1, 7
        %v1270 = vld [vmem:[%s1269] ss:$8 sm:$0x3]
        %v1272 = vperm.slane %v1270, 0
        %v1273 = vperm.slane %v1270, 1
        %v1276 = vmul.f32 %v1261, %v1272
        %v1277 = vmul.f32 %v1265, %v1273
        %v1278 = vmul.f32 %v1262, %v1272
        %v1279 = vmul.f32 %v1266, %v1273
        %v1280 = vmul.f32 %v1263, %v1272
        %v1281 = vmul.f32 %v1267, %v1273
        %v1282 = vmul.f32 %v1264, %v1272
        %v1283 = vmul.f32 %v1268, %v1273
        %s1284 = scalar_lea.vmem [#allocation2], 224
        %v1285 = vld [vmem:[%s1284] sm:$0xff]
        %v1286 = vld [vmem:[%s1284 + $0x8] sm:$0xff]
        %v1287 = vld [vmem:[%s1284 + $0x10] sm:$0xff]
        %v1288 = vld [vmem:[%s1284 + $0x18] sm:$0xff]
        %v1290 = vsel %vm528, %v1285, 0
        %v1293 = vsel %vm528, %v1286, 0
        %v1296 = vsel %vm528, %v1287, 0
        %v1299 = vsel %vm528, %v1288, 0
        %1301 = vmatpush.msra.mxu0 0.0
        %1302 = vmatpush.msra.mxu0 0.0
        %1303 = vmatpush.msra.mxu0 0.0
        %1304 = vmatpush.msra.mxu0 0.0
        %1305 = vmatpush.msra.mxu0 0.0
        %1306 = vmatpush.msra.mxu0 0.0
        %1307 = vmatpush.msra.mxu0 0.0
        %1308 = vmatpush.msra.mxu0 0.0
        %1309 = vmatpush.msra.mxu0 0.0
        %1310 = vmatpush.msra.mxu0 0.0
        %1311 = vmatpush.msra.mxu0 0.0
        %1312 = vmatpush.msra.mxu0 0.0
        %1313 = vmatpush.msra.mxu0 %v1282
        %1314 = vmatpush.msra.mxu0 %v1280
        %1315 = vmatpush.msra.mxu0 %v1278
        %1316 = vmatpush.msra.mxu0 %v1276
        %1317 = vmatmul.f32.gmra.mxu0 %v1290
        %v1318 = vpop.f32.mrf.mxu0
        %v1319 = vadd.f32 0.0, %v1318
        %1320 = vmatmul.f32.gmra.mxu0 %v1293
        %v1321 = vpop.f32.mrf.mxu0
        %v1322 = vadd.f32 0.0, %v1321
        %1323 = vmatmul.f32.gmra.mxu0 %v1296
        %v1324 = vpop.f32.mrf.mxu0
        %v1325 = vadd.f32 0.0, %v1324
        %1326 = vmatmul.f32.gmra.mxu0 %v1299
        %v1327 = vpop.f32.mrf.mxu0
        %v1328 = vadd.f32 0.0, %v1327
        %1329 = vdwg.mxu0
        %1330 = vmatpush.msra.mxu0 0.0
        %1331 = vmatpush.msra.mxu0 0.0
        %1332 = vmatpush.msra.mxu0 0.0
        %1333 = vmatpush.msra.mxu0 0.0
        %1334 = vmatpush.msra.mxu0 0.0
        %1335 = vmatpush.msra.mxu0 0.0
        %1336 = vmatpush.msra.mxu0 0.0
        %1337 = vmatpush.msra.mxu0 0.0
        %1338 = vmatpush.msra.mxu0 0.0
        %1339 = vmatpush.msra.mxu0 0.0
        %1340 = vmatpush.msra.mxu0 0.0
        %1341 = vmatpush.msra.mxu0 0.0
        %1342 = vmatpush.msra.mxu0 %v1283
        %1343 = vmatpush.msra.mxu0 %v1281
        %1344 = vmatpush.msra.mxu0 %v1279
        %1345 = vmatpush.msra.mxu0 %v1277
        %1346 = vmatmul.f32.gmra.mxu0 %v1290
        %v1347 = vpop.f32.mrf.mxu0
        %v1348 = vadd.f32 0.0, %v1347
        %1349 = vmatmul.f32.gmra.mxu0 %v1293
        %v1350 = vpop.f32.mrf.mxu0
        %v1351 = vadd.f32 0.0, %v1350
        %1352 = vmatmul.f32.gmra.mxu0 %v1296
        %v1353 = vpop.f32.mrf.mxu0
        %v1354 = vadd.f32 0.0, %v1353
        %1355 = vmatmul.f32.gmra.mxu0 %v1299
        %v1356 = vpop.f32.mrf.mxu0
        %v1357 = vadd.f32 0.0, %v1356
        %1358 = vdwg.mxu0
        %v1359 = vadd.f32 %v1236, %v1319
        %v1360 = vadd.f32 %v1237, %v1348
        %v1361 = vadd.f32 %v1238, %v1322
        %v1362 = vadd.f32 %v1239, %v1351
        %v1363 = vadd.f32 %v1240, %v1325
        %v1364 = vadd.f32 %v1241, %v1354
        %v1365 = vadd.f32 %v1242, %v1328
        %v1366 = vadd.f32 %v1243, %v1357
        %1367 = vrot.lane.b32.xlu0 %v430, 111
        %v1368 = vpop.permute.xlu0 %1367
        %1369 = vrot.lane.b32.xlu0 %v432, 111
        %v1370 = vpop.permute.xlu0 %1369
        %1371 = vrot.lane.b32.xlu0 %v434, 111
        %v1372 = vpop.permute.xlu0 %1371
        %1373 = vrot.lane.b32.xlu0 %v436, 111
        %v1374 = vpop.permute.xlu0 %1373
        %1375 = vrot.lane.b32.xlu0 %v431, 111
        %v1376 = vpop.permute.xlu0 %1375
        %1377 = vrot.lane.b32.xlu0 %v433, 111
        %v1378 = vpop.permute.xlu0 %1377
        %1379 = vrot.lane.b32.xlu0 %v435, 111
        %v1380 = vpop.permute.xlu0 %1379
        %1381 = vrot.lane.b32.xlu0 %v437, 111
        %v1382 = vpop.permute.xlu0 %1381
        %vm1383 = vcmp.lt.s32.totalorder %v455, 111
        %v1384 = vsel %vm1383, %v1368, %v1376
        %v1385 = vsel %vm1383, %v1370, %v1378
        %v1386 = vsel %vm1383, %v1372, %v1380
        %v1387 = vsel %vm1383, %v1374, %v1382
        %v1388 = vsel %vm1383, %v1376, %v1368
        %v1389 = vsel %vm1383, %v1378, %v1370
        %v1390 = vsel %vm1383, %v1380, %v1372
        %v1391 = vsel %vm1383, %v1382, %v1374
        %s1392 = scalar_lea.vmem %s1, 16
        %v1393 = vld [vmem:[%s1392] ss:$8 sm:$0x3]
        %v1395 = vperm.slane %v1393, 0
        %v1396 = vperm.slane %v1393, 1
        %v1399 = vmul.f32 %v1384, %v1395
        %v1400 = vmul.f32 %v1388, %v1396
        %v1401 = vmul.f32 %v1385, %v1395
        %v1402 = vmul.f32 %v1389, %v1396
        %v1403 = vmul.f32 %v1386, %v1395
        %v1404 = vmul.f32 %v1390, %v1396
        %v1405 = vmul.f32 %v1387, %v1395
        %v1406 = vmul.f32 %v1391, %v1396
        %s1407 = scalar_lea.vmem [#allocation2], 256
        %v1408 = vld [vmem:[%s1407] sm:$0xff]
        %v1409 = vld [vmem:[%s1407 + $0x8] sm:$0xff]
        %v1410 = vld [vmem:[%s1407 + $0x10] sm:$0xff]
        %v1411 = vld [vmem:[%s1407 + $0x18] sm:$0xff]
        %v1413 = vsel %vm528, %v1408, 0
        %v1416 = vsel %vm528, %v1409, 0
        %v1419 = vsel %vm528, %v1410, 0
        %v1422 = vsel %vm528, %v1411, 0
        %1424 = vmatpush.msra.mxu0 0.0
        %1425 = vmatpush.msra.mxu0 0.0
        %1426 = vmatpush.msra.mxu0 0.0
        %1427 = vmatpush.msra.mxu0 0.0
        %1428 = vmatpush.msra.mxu0 0.0
        %1429 = vmatpush.msra.mxu0 0.0
        %1430 = vmatpush.msra.mxu0 0.0
        %1431 = vmatpush.msra.mxu0 0.0
        %1432 = vmatpush.msra.mxu0 0.0
        %1433 = vmatpush.msra.mxu0 0.0
        %1434 = vmatpush.msra.mxu0 0.0
        %1435 = vmatpush.msra.mxu0 0.0
        %1436 = vmatpush.msra.mxu0 %v1405
        %1437 = vmatpush.msra.mxu0 %v1403
        %1438 = vmatpush.msra.mxu0 %v1401
        %1439 = vmatpush.msra.mxu0 %v1399
        %1440 = vmatmul.f32.gmra.mxu0 %v1413
        %v1441 = vpop.f32.mrf.mxu0
        %v1442 = vadd.f32 0.0, %v1441
        %1443 = vmatmul.f32.gmra.mxu0 %v1416
        %v1444 = vpop.f32.mrf.mxu0
        %v1445 = vadd.f32 0.0, %v1444
        %1446 = vmatmul.f32.gmra.mxu0 %v1419
        %v1447 = vpop.f32.mrf.mxu0
        %v1448 = vadd.f32 0.0, %v1447
        %1449 = vmatmul.f32.gmra.mxu0 %v1422
        %v1450 = vpop.f32.mrf.mxu0
        %v1451 = vadd.f32 0.0, %v1450
        %1452 = vdwg.mxu0
        %1453 = vmatpush.msra.mxu0 0.0
        %1454 = vmatpush.msra.mxu0 0.0
        %1455 = vmatpush.msra.mxu0 0.0
        %1456 = vmatpush.msra.mxu0 0.0
        %1457 = vmatpush.msra.mxu0 0.0
        %1458 = vmatpush.msra.mxu0 0.0
        %1459 = vmatpush.msra.mxu0 0.0
        %1460 = vmatpush.msra.mxu0 0.0
        %1461 = vmatpush.msra.mxu0 0.0
        %1462 = vmatpush.msra.mxu0 0.0
        %1463 = vmatpush.msra.mxu0 0.0
        %1464 = vmatpush.msra.mxu0 0.0
        %1465 = vmatpush.msra.mxu0 %v1406
        %1466 = vmatpush.msra.mxu0 %v1404
        %1467 = vmatpush.msra.mxu0 %v1402
        %1468 = vmatpush.msra.mxu0 %v1400
        %1469 = vmatmul.f32.gmra.mxu0 %v1413
        %v1470 = vpop.f32.mrf.mxu0
        %v1471 = vadd.f32 0.0, %v1470
        %1472 = vmatmul.f32.gmra.mxu0 %v1416
        %v1473 = vpop.f32.mrf.mxu0
        %v1474 = vadd.f32 0.0, %v1473
        %1475 = vmatmul.f32.gmra.mxu0 %v1419
        %v1476 = vpop.f32.mrf.mxu0
        %v1477 = vadd.f32 0.0, %v1476
        %1478 = vmatmul.f32.gmra.mxu0 %v1422
        %v1479 = vpop.f32.mrf.mxu0
        %v1480 = vadd.f32 0.0, %v1479
        %1481 = vdwg.mxu0
        %v1482 = vadd.f32 %v1359, %v1442
        %v1483 = vadd.f32 %v1360, %v1471
        %v1484 = vadd.f32 %v1361, %v1445
        %v1485 = vadd.f32 %v1362, %v1474
        %v1486 = vadd.f32 %v1363, %v1448
        %v1487 = vadd.f32 %v1364, %v1477
        %v1488 = vadd.f32 %v1365, %v1451
        %v1489 = vadd.f32 %v1366, %v1480
        %v1490 = vld [vmem:[%s5] sm:$0xff]
        %v1491 = vld [vmem:[%s5 + $0x8] sm:$0xff]
        %v1492 = vld [vmem:[%s5 + $0x10] sm:$0xff]
        %v1493 = vld [vmem:[%s5 + $0x18] sm:$0xff]
        %1495 = vset.pattern.permute.xlu0 0
        %1496 = vperm.xlu0 %1495, %v1490
        %v1497 = vpop.permute.xlu0 %1496
        %1500 = vset.pattern.permute.xlu0 0
        %1501 = vperm.xlu0 %1500, %v1491
        %v1502 = vpop.permute.xlu0 %1501
        %1505 = vset.pattern.permute.xlu0 0
        %1506 = vperm.xlu0 %1505, %v1492
        %v1507 = vpop.permute.xlu0 %1506
        %1510 = vset.pattern.permute.xlu0 0
        %1511 = vperm.xlu0 %1510, %v1493
        %v1512 = vpop.permute.xlu0 %1511
        %v1514 = vadd.f32 %v1482, %v1497
        %v1515 = vadd.f32 %v1483, %v1497
        %v1516 = vadd.f32 %v1484, %v1502
        %v1517 = vadd.f32 %v1485, %v1502
        %v1518 = vadd.f32 %v1486, %v1507
        %v1519 = vadd.f32 %v1487, %v1507
        %v1520 = vadd.f32 %v1488, %v1512
        %v1521 = vadd.f32 %v1489, %v1512
        %v1522 = vmax.f32 %v1514, 0.0
        %v1523 = vmax.f32 %v1515, 0.0
        %v1524 = vmax.f32 %v1516, 0.0
        %v1525 = vmax.f32 %v1517, 0.0
        %v1526 = vmax.f32 %v1518, 0.0
        %v1527 = vmax.f32 %v1519, 0.0
        %v1528 = vmax.f32 %v1520, 0.0
        %v1529 = vmax.f32 %v1521, 0.0
        %v1530 = vld [vmem:[%s6] sm:$0xf]
        %v1531 = vld [vmem:[%s7] sm:$0xf]
        %1533 = vset.pattern.permute.xlu0 0
        %1534 = vperm.xlu0 %1533, %v1531
        %v1535 = vpop.permute.xlu0 %1534
        %v1538 = vsel %vm528, %v1530, 0
        %1540 = vmatpush.msra.mxu0 0.0
        %1541 = vmatpush.msra.mxu0 0.0
        %1542 = vmatpush.msra.mxu0 0.0
        %1543 = vmatpush.msra.mxu0 0.0
        %1544 = vmatpush.msra.mxu0 0.0
        %1545 = vmatpush.msra.mxu0 0.0
        %1546 = vmatpush.msra.mxu0 0.0
        %1547 = vmatpush.msra.mxu0 0.0
        %1548 = vmatpush.msra.mxu0 0.0
        %1549 = vmatpush.msra.mxu0 0.0
        %1550 = vmatpush.msra.mxu0 0.0
        %1551 = vmatpush.msra.mxu0 0.0
        %1552 = vmatpush.msra.mxu0 %v1528
        %1553 = vmatpush.msra.mxu0 %v1526
        %1554 = vmatpush.msra.mxu0 %v1524
        %1555 = vmatpush.msra.mxu0 %v1522
        %1556 = vmatmul.f32.gmra.mxu0 %v1538
        %v1557 = vpop.f32.mrf.mxu0
        %v1558 = vadd.f32 %v1535, %v1557
        %1559 = vdwg.mxu0
        %1560 = vmatpush.msra.mxu0 0.0
        %1561 = vmatpush.msra.mxu0 0.0
        %1562 = vmatpush.msra.mxu0 0.0
        %1563 = vmatpush.msra.mxu0 0.0
        %1564 = vmatpush.msra.mxu0 0.0
        %1565 = vmatpush.msra.mxu0 0.0
        %1566 = vmatpush.msra.mxu0 0.0
        %1567 = vmatpush.msra.mxu0 0.0
        %1568 = vmatpush.msra.mxu0 0.0
        %1569 = vmatpush.msra.mxu0 0.0
        %1570 = vmatpush.msra.mxu0 0.0
        %1571 = vmatpush.msra.mxu0 0.0
        %1572 = vmatpush.msra.mxu0 %v1529
        %1573 = vmatpush.msra.mxu0 %v1527
        %1574 = vmatpush.msra.mxu0 %v1525
        %1575 = vmatpush.msra.mxu0 %v1523
        %1576 = vmatmul.f32.gmra.mxu0 %v1538
        %v1577 = vpop.f32.mrf.mxu0
        %v1578 = vadd.f32 %v1535, %v1577
        %1579 = vdwg.mxu0
        %v1582 = vrot.slane %v1578, 4
        %v1583 = vsel %vm367, %v1558, %v1582
        %1585 = vst [vmem:[%s315] sm:$0xff] %v1583
        %s1586 = sand.u32 %s204, 1
        %s1587 = scalar_lea.sflag [#allocation4], %s1586
        %s1588 = sand.u32 %s204, 1
        %s1589 = smul.addr %s1588, 8
        %s1590 = scalar_lea.vmem [#allocation5], %s1589
        // Predicated region
        $region57: #{tpu_custom_call.1} parent=51 // pred_check
          %p1591 = pneg %p214
        $region58: #{tpu_custom_call.1} parent=51 // pred_check_branch
          %1593 = sbr.rel (%p1591) target = $region60
        $region59: #{tpu_custom_call.1} parent=51 // pred_region
          %1595 = vsyncadd %s1587, 0
          %s1596 = smul.addr %s23, 2
          %s1597 = smul.addr %s1596, 4
          %s1598 = scalar_lea.hbm %s8, %s1597
          %s1600 = sshll.u32 %s1590, 4
          %s1601 = int_to_ptr.vmem [resolvable:$true] %s1600
          %s1602 = sshll.u32 %s1598, 4
          %s1603 = int_to_ptr.hbm [resolvable:$true] %s1602
          %1605 = dma.vmem_to_hbm [thread:$0]  %s1601, 128, %s1603, %s1587
        $region60: #{tpu_custom_call.1} parent=51 // pred_fallthru
          _
      $region52: #{tpu_custom_call.1} parent=5 // pred_fallthru
        _
      %p1606 = scmp.le.s32.totalorder 2, %s18
      // Predicated region
      $region61: #{tpu_custom_call.1} parent=5 // pred_check
        %p1607 = pneg %p1606
      $region62: #{tpu_custom_call.1} parent=5 // pred_check_branch
        %1609 = sbr.rel (%p1607) target = $region64
      $region63: #{tpu_custom_call.1} parent=5 // pred_region
        %s1610 = ssub.s32 %s18, 2
        // Predicated region
        $region65: #{tpu_custom_call.1} parent=63 // pred_check
          %p1611 = pneg %p220
        $region66: #{tpu_custom_call.1} parent=63 // pred_check_branch
          %1613 = sbr.rel (%p1611) target = $region68
        $region67: #{tpu_custom_call.1} parent=63 // pred_region
          %s1614 = sand.u32 %s205, 1
          %s1615 = scalar_lea.sflag [#allocation4], %s1614
          %s1616 = sand.u32 %s205, 1
          %s1617 = smul.addr %s1616, 8
          %s1618 = scalar_lea.vmem [#allocation5], %s1617
          %1620 = dma.done %s1615, 128
        $region68: #{tpu_custom_call.1} parent=63 // pred_fallthru
          _
      $region64: #{tpu_custom_call.1} parent=5 // pred_fallthru
        _
    $region6: #{tpu_custom_call.1} parent=1 // loop_footer
      %s22 = sadd.s32 1, %s18
    $region7: #{tpu_custom_call.1} parent=1 // loop_footer_branch
      %17 = sbr.rel target = $region3
    $region8: #{tpu_custom_call.1} parent=1 // loop_exit
      _
    %1621 = vsyncpa [#allocation3], 1
    %s1622 = scalar_lea.sflag [#allocation3], 1
    %1623 = vsyncpa %s1622, 1
    %1624 = vsyncpa [#allocation4], 1
    %s1625 = scalar_lea.sflag [#allocation4], 1
    %1626 = vsyncpa %s1625, 1

</llo_original>
